<compile_context>
chip_gen: v7x
topology: tpu7x:2x2x1
jax: 0.10.0
libtpu: 0.0.40
codegen_flags: <defaults>
</compile_context>

<pallas_src>
import math

import jax
import jax.numpy as jnp
from jax.experimental import pallas as pl
from jax.experimental.pallas import tpu as pltpu


# ---------------------------- fused decoder-block kernel ----------------------------

def _decoder_block_kernel(num_heads, head_dim, has_mask, need_sim):
    E = num_heads * head_dim

    def _mm(a, b):
        # MXU matmul: bf16 operands (full rate on v5e/v6e/v7x), f32 accumulation.
        return jnp.dot(a.astype(jnp.bfloat16), b, preferred_element_type=jnp.float32)

    def _softmax(s):
        # f32 softmax; denominator reciprocal goes to the EUP slot (near-free).
        s = s - jnp.max(s, axis=-1, keepdims=True)
        e = jnp.exp(s)
        return e * pl.reciprocal(jnp.sum(e, axis=-1, keepdims=True), approx=True)

    def _add_ln(x, res, g, b, eps=1e-5):
        # LayerNorm(x + res), PyTorch defaults (eps=1e-5, elementwise affine), f32.
        y = x + res
        mean = jnp.mean(y, axis=-1, keepdims=True)
        var = jnp.mean((y - mean) ** 2, axis=-1, keepdims=True)
        return (y - mean) * jax.lax.rsqrt(var + eps) * g + b

    def _mha(q3, kv3, fc_w_ref, fc_b_ref, mask, sim_ref):
        """Multi-head attention with the output fc folded into the head loop.

        q3:  (NB, Sq, E)  f32 head-packed queries (1/head_dim already folded into W_q)
        kv3: (NB, Sk, 2E) f32 head-packed keys / values
        Returns ReLU(fc(concat_h score_h) + b) as (NB*Sq, E) f32 WITHOUT materializing
        the lane-axis concat: fc = sum_h score_h @ W_fc[h*Hd:(h+1)*Hd, :].
        Per-head probabilities are stored straight into sim_ref (no concat).
        """
        NB, Sq = q3.shape[0], q3.shape[1]
        Sk = kv3.shape[1]
        fc_acc = jnp.zeros((NB * Sq, E), jnp.float32)
        # TODO(synk): at production sizes choose/pad head_dim to a multiple of 128 so
        # these per-head slices are lane-aligned (unmasked vld, full MXU K occupancy).
        for h in range(num_heads):                         # tiny static head count
            lo, hi = h * head_dim, (h + 1) * head_dim
            q = q3[:, :, lo:hi].astype(jnp.bfloat16)
            k = kv3[:, :, lo:hi].astype(jnp.bfloat16)
            v = kv3[:, :, E + lo:E + hi].astype(jnp.bfloat16)
            # contract last dims directly -> no explicit k.T (no XLU transpose)
            s = jnp.einsum('bqd,bkd->bqk', q, k,
                           preferred_element_type=jnp.float32)      # (NB, Sq, Sk)
            if mask is not None:
                s = s + mask                               # additive (-inf/0) mask
            p = _softmax(s)                                # f32 probabilities
            if sim_ref is not None:
                # direct per-head store into its contiguous window (lane-dense when
                # S >= 128); layout matches the module: (B, S, H*S) head-major.
                sim_ref[:, :, h * Sk:(h + 1) * Sk] = p
            sc = jnp.einsum('bqk,bkd->bqd', p.astype(jnp.bfloat16), v,
                            preferred_element_type=jnp.float32)     # (NB, Sq, Hd)
            fc_acc = fc_acc + _mm(sc.reshape(NB * Sq, head_dim), fc_w_ref[lo:hi, :])
        return jnp.maximum(fc_acc + fc_b_ref[...], 0.0)    # fc bias + ReLU epilogue

    def kernel(*refs):
        x_ref, enc_ref = refs[0], refs[1]
        idx = 2
        if has_mask:
            mask = refs[2][...]                            # (S,S) or (NB,S,S) additive
            idx = 3
        else:
            mask = None
        (wqkv_sa_ref, fc_sa_w_ref, fc_sa_b_ref, ln1_g_ref, ln1_b_ref,
         wq_ca_ref, wkv_ca_ref, fc_ca_w_ref, fc_ca_b_ref, ln2_g_ref, ln2_b_ref,
         w1_ref, b1_ref, w2_ref, b2_ref, ln3_g_ref, ln3_b_ref) = refs[idx:idx + 17]
        out_ref = refs[idx + 17]
        sim_ref = refs[idx + 18] if need_sim else None

        NB, S, _ = x_ref.shape
        Se = enc_ref.shape[1]

        # Fold the batch block into the sublane axis: (NB*S, E) projections keep the
        # MXU sublanes occupied and amortize weight reads (single-TC v5e/v6e advice).
        x = x_ref[...].reshape(NB * S, E)                  # f32 residual path
        enc = enc_ref[...].reshape(NB * Se, E)

        # ---- masked multi-head self-attention (single fused QKV matmul) + fc/ReLU ----
        qkv = _mm(x, wqkv_sa_ref[...]).reshape(NB, S, 3 * E)     # one MXU pass
        attn_sa = _mha(qkv[:, :, :E], qkv[:, :, E:], fc_sa_w_ref, fc_sa_b_ref,
                       mask, sim_ref)
        h1 = _add_ln(x, attn_sa, ln1_g_ref[...], ln1_b_ref[...])

        # ---- cross attention over encoder output (mask=None) + fc/ReLU ----
        q_ca = _mm(h1, wq_ca_ref[...]).reshape(NB, S, E)
        kv_ca = _mm(enc, wkv_ca_ref[...]).reshape(NB, Se, 2 * E)
        # TODO(synk): original `x + self.attention(...)` adds a (score, sim) tuple to a
        # Tensor (would raise in PyTorch); the intended `score` component is used here.
        attn_ca = _mha(q_ca, kv_ca, fc_ca_w_ref, fc_ca_b_ref, None, None)
        h2 = _add_ln(h1, attn_ca, ln2_g_ref[...], ln2_b_ref[...])

        # ---- MLP: Linear(E, hidden) -> GELU -> Linear(hidden, E) ----
        # TODO(synk): MLP source not provided; tanh-approx GELU used per perf review
        # (routes transcendental work to the EUP); nn.GELU() default is exact erf.
        hmid = jax.nn.gelu(_mm(h2, w1_ref[...]) + b1_ref[...], approximate=True)
        mlp = _mm(hmid, w2_ref[...]) + b2_ref[...]
        h3 = _add_ln(h2, mlp, ln3_g_ref[...], ln3_b_ref[...])

        out_ref[...] = h3.reshape(NB, S, E)

    return kernel


# ---------------------------- wrapper ----------------------------

_WEIGHT_ORDER = ("w_qkv_sa", "fc_sa_w", "fc_sa_b", "ln1_g", "ln1_b",
                 "w_q_ca", "w_kv_ca", "fc_ca_w", "fc_ca_b", "ln2_g", "ln2_b",
                 "mlp_w1", "mlp_b1", "mlp_w2", "mlp_b2", "ln3_g", "ln3_b")
# matmul operands go to the MXU in bf16 (halves weight DMA); biases / LN params stay f32
_BF16_WEIGHTS = frozenset(("w_qkv_sa", "fc_sa_w", "w_q_ca", "w_kv_ca", "fc_ca_w",
                           "mlp_w1", "mlp_w2"))


def transformer_decoder_block(params, x, enc_out, tgt_mask=None, *,
                              batch_block=None, need_sim=True):
    """Fused TransformerDecoderBlock.forward.

    x: (B, S, E) f32; enc_out: (B, Se, E) f32.
    tgt_mask: additive mask (0 keep, -inf masked), either (S, S) (batch-invariant,
      kept resident in VMEM with no per-step re-DMA) or (B, S, S); or None.
    batch_block: batch elements processed per grid step.  None (default) folds the
      whole batch into one step (best on single-TC v5e/v6e).  For v7x megacore pass
      batch_block=B//2 so each TensorCore takes half the batch.
    need_sim: if False the similarity output is neither computed nor written back
      (it dominates HBM writeback at large S).
    """
    B, S, E = x.shape
    Se = enc_out.shape[1]
    H = params["num_heads"]
    Hd = E // H
    has_mask = tgt_mask is not None

    NB = B if batch_block is None else int(batch_block)
    assert B % NB == 0, "batch_block must divide the batch size"
    grid = (B // NB,)

    in_specs = [
        pl.BlockSpec((NB, S, E), lambda i: (i, 0, 0)),      # x
        pl.BlockSpec((NB, Se, E), lambda i: (i, 0, 0)),     # enc_out
    ]
    args = [x.astype(jnp.float32), enc_out.astype(jnp.float32)]
    if has_mask:
        if tgt_mask.ndim == 2:
            # Batch-invariant mask: whole array resident in VMEM for the entire call
            # (fetched once, single-buffered, no per-step re-DMA).
            in_specs.append(pl.BlockSpec(memory_space=pltpu.MemorySpace.VMEM))
        else:
            in_specs.append(pl.BlockSpec((NB, S, S), lambda i: (i, 0, 0)))
        args.append(tgt_mask.astype(jnp.float32))

    for name in _WEIGHT_ORDER:
        w = params[name]
        if name in _BF16_WEIGHTS:
            w = w.astype(jnp.bfloat16)
        # Whole weight resident in VMEM for the entire call: fetched once and
        # single-buffered (addresses the "Buffered(1)" / weight-DMA review items).
        in_specs.append(pl.BlockSpec(memory_space=pltpu.MemorySpace.VMEM))
        args.append(w)

    out_shape = [jax.ShapeDtypeStruct((B, S, E), jnp.float32)]
    out_specs = [pl.BlockSpec((NB, S, E), lambda i: (i, 0, 0))]
    if need_sim:
        # sim layout matches the module: (B, S, H*S), written per-head (no concat).
        out_shape.append(jax.ShapeDtypeStruct((B, S, H * S), jnp.float32))
        out_specs.append(pl.BlockSpec((NB, S, H * S), lambda i: (i, 0, 0)))

    # Explicit VMEM budget (default scoped limit is 16/32 MiB; v7x physical is 64 MiB).
    hidden = params["mlp_w1"].shape[1]
    weight_bytes = sum((2 if n in _BF16_WEIGHTS else 4) * math.prod(params[n].shape)
                       for n in _WEIGHT_ORDER)
    io_bytes = 4 * NB * (2 * S * E + Se * E + (H * S * S if need_sim else 0))
    mask_bytes = 4 * math.prod(tgt_mask.shape) if has_mask else 0
    act_bytes = 4 * NB * S * (3 * E + hidden + H * S)
    est = weight_bytes + 2 * io_bytes + mask_bytes + 4 * act_bytes
    vmem_limit_bytes = int(min(max(4 * est, 32 * 1024 * 1024), 128 * 1024 * 1024))

    # TODO(synk): for v7x at large S/E (64 MiB VMEM), add a sequence-tile grid axis
    # (flash-style K/V streaming + per-tile sim writeback) instead of fully-resident.
    results = pl.pallas_call(
        _decoder_block_kernel(H, Hd, has_mask, need_sim),
        out_shape=tuple(out_shape),
        grid=grid,
        in_specs=in_specs,
        out_specs=tuple(out_specs),
        compiler_params=pltpu.CompilerParams(
            dimension_semantics=("parallel",),             # v7x: batch blocks per TC
            vmem_limit_bytes=vmem_limit_bytes),
    )(*args)

    if need_sim:
        out, sim = results
        return out, sim
    return results[0], None


# ---------------------------- params ----------------------------

def _normal(key, shape, scale=0.1):
    return scale * jax.random.normal(key, shape, jnp.float32)


def init_decoder_block(key, E, H, hidden_dim):
    """Per-head nn.Linear(E, Hd) weights are generated, then packed head-major into the
    fused projection matrices used by the kernel (1/head_dim softmax scale folded into
    W_q).  Params are f32; the wrapper casts matmul weights to bf16."""
    Hd = E // H
    ks = jax.random.split(key, 14)

    def pack(w):                                            # (H, E, Hd) -> (E, H*Hd)
        return jnp.transpose(w, (1, 0, 2)).reshape(E, H * Hd)

    wq_sa, wk_sa, wv_sa = (_normal(ks[i], (H, E, Hd)) for i in range(3))
    wq_ca, wk_ca, wv_ca = (_normal(ks[3 + i], (H, E, Hd)) for i in range(3))

    return {
        "num_heads": H,
        # self-attention: fused (E, 3E) QKV weight, softmax 1/head_dim folded into Wq
        "w_qkv_sa": jnp.concatenate(
            [pack(wq_sa) / float(Hd), pack(wk_sa), pack(wv_sa)], axis=1),
        "fc_sa_w": _normal(ks[6], (E, E)), "fc_sa_b": _normal(ks[7], (1, E)),
        "ln1_g": jnp.ones((1, E), jnp.float32), "ln1_b": jnp.zeros((1, E), jnp.float32),
        # cross-attention: Q from decoder state, fused (E, 2E) KV from encoder output
        "w_q_ca": pack(wq_ca) / float(Hd),
        "w_kv_ca": jnp.concatenate([pack(wk_ca), pack(wv_ca)], axis=1),
        "fc_ca_w": _normal(ks[8], (E, E)), "fc_ca_b": _normal(ks[9], (1, E)),
        "ln2_g": jnp.ones((1, E), jnp.float32), "ln2_b": jnp.zeros((1, E), jnp.float32),
        "mlp_w1": _normal(ks[10], (E, hidden_dim)), "mlp_b1": _normal(ks[11], (1, hidden_dim)),
        "mlp_w2": _normal(ks[12], (hidden_dim, E)), "mlp_b2": _normal(ks[13], (1, E)),
        "ln3_g": jnp.ones((1, E), jnp.float32), "ln3_b": jnp.zeros((1, E), jnp.float32),
    }


# ---------------------------- main ----------------------------

if __name__ == "__main__":
    B, S, SE, EMBED, HEADS, HIDDEN = 2, 8, 8, 32, 2, 64
    # TODO(synk): at these tiny dims every matmul underfills the MXU; pad E/Hd/S to
    # (8,128)-aligned tiles (or batch many blocks) before tuning at production sizes.

    root = jax.random.PRNGKey(0)
    k_params, k_x, k_enc = jax.random.split(root, 3)

    params = init_decoder_block(k_params, EMBED, HEADS, HIDDEN)
    x = jax.random.normal(k_x, (B, S, EMBED), jnp.float32)
    enc_out = jax.random.normal(k_enc, (B, SE, EMBED), jnp.float32)

    # batch-invariant additive causal mask (2D -> fetched once, resident in VMEM)
    causal = jnp.tril(jnp.ones((S, S), jnp.float32))
    tgt_mask = jnp.where(causal == 1.0, 0.0, -1e9)

    out, sim = transformer_decoder_block(params, x, enc_out, tgt_mask)
    out = jax.block_until_ready(out)
    sim = jax.block_until_ready(sim)

    assert out.shape == (B, S, EMBED), out.shape
    assert sim.shape == (B, S, HEADS * S), sim.shape
    assert bool(jnp.all(jnp.isfinite(out)))
    assert bool(jnp.all(jnp.isfinite(sim)))
    print("KERNEL_OK")
</pallas_src>

<mosaic_0001>
module attributes {stable_mosaic.version = 11 : i64} {
  func.func @kernel(%arg0: i32, %arg1: memref<2x8x32xf32, #tpu.memory_space<vmem>>, %arg2: memref<2x8x32xf32, #tpu.memory_space<vmem>>, %arg3: memref<8x8xf32, #tpu.memory_space<vmem>>, %arg4: memref<32x96xbf16, #tpu.memory_space<vmem>>, %arg5: memref<32x32xbf16, #tpu.memory_space<vmem>>, %arg6: memref<1x32xf32, #tpu.memory_space<vmem>>, %arg7: memref<1x32xf32, #tpu.memory_space<vmem>>, %arg8: memref<1x32xf32, #tpu.memory_space<vmem>>, %arg9: memref<32x32xbf16, #tpu.memory_space<vmem>>, %arg10: memref<32x64xbf16, #tpu.memory_space<vmem>>, %arg11: memref<32x32xbf16, #tpu.memory_space<vmem>>, %arg12: memref<1x32xf32, #tpu.memory_space<vmem>>, %arg13: memref<1x32xf32, #tpu.memory_space<vmem>>, %arg14: memref<1x32xf32, #tpu.memory_space<vmem>>, %arg15: memref<32x64xbf16, #tpu.memory_space<vmem>>, %arg16: memref<1x64xf32, #tpu.memory_space<vmem>>, %arg17: memref<64x32xbf16, #tpu.memory_space<vmem>>, %arg18: memref<1x32xf32, #tpu.memory_space<vmem>>, %arg19: memref<1x32xf32, #tpu.memory_space<vmem>>, %arg20: memref<1x32xf32, #tpu.memory_space<vmem>>, %arg21: memref<2x8x32xf32, #tpu.memory_space<vmem>>, %arg22: memref<2x8x16xf32, #tpu.memory_space<vmem>>) attributes {dimension_semantics = [#tpu.dimension_semantics<parallel>], iteration_bounds = array<i64: 1>, scalar_prefetch = 0 : i64, scratch_operands = 0 : i64, tpu.core_type = #tpu.core_type<tc>, window_params = [{transform_indices = @transform_0, window_bounds = array<i64: 2, 8, 32>}, {transform_indices = @transform_1, window_bounds = array<i64: 2, 8, 32>}, {pipeline_mode = #tpu.pipeline_mode<synchronous>, transform_indices = @transform_2, window_bounds = array<i64: 8, 8>}, {pipeline_mode = #tpu.pipeline_mode<synchronous>, transform_indices = @transform_3, window_bounds = array<i64: 32, 96>}, {pipeline_mode = #tpu.pipeline_mode<synchronous>, transform_indices = @transform_4, window_bounds = array<i64: 32, 32>}, {pipeline_mode = #tpu.pipeline_mode<synchronous>, transform_indices = @transform_5, window_bounds = array<i64: 1, 32>}, {pipeline_mode = #tpu.pipeline_mode<synchronous>, transform_indices = @transform_6, window_bounds = array<i64: 1, 32>}, {pipeline_mode = #tpu.pipeline_mode<synchronous>, transform_indices = @transform_7, window_bounds = array<i64: 1, 32>}, {pipeline_mode = #tpu.pipeline_mode<synchronous>, transform_indices = @transform_8, window_bounds = array<i64: 32, 32>}, {pipeline_mode = #tpu.pipeline_mode<synchronous>, transform_indices = @transform_9, window_bounds = array<i64: 32, 64>}, {pipeline_mode = #tpu.pipeline_mode<synchronous>, transform_indices = @transform_10, window_bounds = array<i64: 32, 32>}, {pipeline_mode = #tpu.pipeline_mode<synchronous>, transform_indices = @transform_11, window_bounds = array<i64: 1, 32>}, {pipeline_mode = #tpu.pipeline_mode<synchronous>, transform_indices = @transform_12, window_bounds = array<i64: 1, 32>}, {pipeline_mode = #tpu.pipeline_mode<synchronous>, transform_indices = @transform_13, window_bounds = array<i64: 1, 32>}, {pipeline_mode = #tpu.pipeline_mode<synchronous>, transform_indices = @transform_14, window_bounds = array<i64: 32, 64>}, {pipeline_mode = #tpu.pipeline_mode<synchronous>, transform_indices = @transform_15, window_bounds = array<i64: 1, 64>}, {pipeline_mode = #tpu.pipeline_mode<synchronous>, transform_indices = @transform_16, window_bounds = array<i64: 64, 32>}, {pipeline_mode = #tpu.pipeline_mode<synchronous>, transform_indices = @transform_17, window_bounds = array<i64: 1, 32>}, {pipeline_mode = #tpu.pipeline_mode<synchronous>, transform_indices = @transform_18, window_bounds = array<i64: 1, 32>}, {pipeline_mode = #tpu.pipeline_mode<synchronous>, transform_indices = @transform_19, window_bounds = array<i64: 1, 32>}, {transform_indices = @transform_20, window_bounds = array<i64: 2, 8, 32>}, {transform_indices = @transform_21, window_bounds = array<i64: 2, 8, 16>}]} {
    %c0 = arith.constant 0 : index
    %c0_0 = arith.constant 0 : index
    %0 = vector.load %arg3[%c0, %c0_0] : memref<8x8xf32, #tpu.memory_space<vmem>>, vector<8x8xf32>
    %c0_1 = arith.constant 0 : index
    %c0_2 = arith.constant 0 : index
    %c0_3 = arith.constant 0 : index
    %1 = vector.load %arg1[%c0_1, %c0_2, %c0_3] : memref<2x8x32xf32, #tpu.memory_space<vmem>>, vector<2x8x32xf32>
    %2 = vector.shape_cast %1 : vector<2x8x32xf32> to vector<16x32xf32>
    %c0_4 = arith.constant 0 : index
    %c0_5 = arith.constant 0 : index
    %c0_6 = arith.constant 0 : index
    %3 = vector.load %arg2[%c0_4, %c0_5, %c0_6] : memref<2x8x32xf32, #tpu.memory_space<vmem>>, vector<2x8x32xf32>
    %4 = vector.shape_cast %3 : vector<2x8x32xf32> to vector<16x32xf32>
    %c0_7 = arith.constant 0 : index
    %c0_8 = arith.constant 0 : index
    %5 = vector.load %arg4[%c0_7, %c0_8] : memref<32x96xbf16, #tpu.memory_space<vmem>>, vector<32x96xbf16>
    %6 = arith.truncf %2 : vector<16x32xf32> to vector<16x32xbf16>
    %cst = arith.constant dense<0.000000e+00> : vector<16x96xf32>
    %7 = tpu.matmul %6, %5, %cst {dimension_numbers = #tpu.dot_dimension_numbers<[1], [0], [0], [1], [0, 0, 1, 1], [], []>} : vector<16x32xbf16>, vector<32x96xbf16>, vector<16x96xf32> -> vector<16x96xf32>
    %8 = vector.shape_cast %7 : vector<16x96xf32> to vector<2x8x96xf32>
    %9 = vector.extract_strided_slice %8 {offsets = [0, 0, 0], sizes = [2, 8, 32], strides = [1, 1, 1]} : vector<2x8x96xf32> to vector<2x8x32xf32>
    %10 = vector.extract_strided_slice %8 {offsets = [0, 0, 32], sizes = [2, 8, 64], strides = [1, 1, 1]} : vector<2x8x96xf32> to vector<2x8x64xf32>
    %cst_9 = arith.constant 0.000000e+00 : f32
    %11 = vector.broadcast %cst_9 : f32 to vector<16x32xf32>
    %12 = vector.extract_strided_slice %9 {offsets = [0, 0, 0], sizes = [2, 8, 16], strides = [1, 1, 1]} : vector<2x8x32xf32> to vector<2x8x16xf32>
    %13 = arith.truncf %12 : vector<2x8x16xf32> to vector<2x8x16xbf16>
    %14 = vector.extract_strided_slice %10 {offsets = [0, 0, 0], sizes = [2, 8, 16], strides = [1, 1, 1]} : vector<2x8x64xf32> to vector<2x8x16xf32>
    %15 = arith.truncf %14 : vector<2x8x16xf32> to vector<2x8x16xbf16>
    %16 = vector.extract_strided_slice %10 {offsets = [0, 0, 32], sizes = [2, 8, 16], strides = [1, 1, 1]} : vector<2x8x64xf32> to vector<2x8x16xf32>
    %17 = arith.truncf %16 : vector<2x8x16xf32> to vector<2x8x16xbf16>
    "tpu.trace_start"() <{level = 10 : i32, message = "bqd,bkd->bqk"}> : () -> ()
    %cst_10 = arith.constant dense<0.000000e+00> : vector<2x8x8xf32>
    %18 = tpu.matmul %13, %15, %cst_10 {dimension_numbers = #tpu.dot_dimension_numbers<[2], [2], [1], [1], [0, 0, 0, 1, 1, 1], [0], [0]>} : vector<2x8x16xbf16>, vector<2x8x16xbf16>, vector<2x8x8xf32> -> vector<2x8x8xf32>
    "tpu.trace_stop"() : () -> ()
    %19 = vector.shape_cast %0 : vector<8x8xf32> to vector<1x8x8xf32>
    %20 = vector.broadcast %19 : vector<1x8x8xf32> to vector<2x8x8xf32>
    %21 = arith.addf %18, %20 : vector<2x8x8xf32>
    %cst_11 = arith.constant dense<0xFF800000> : vector<2x8xf32>
    %22 = vector.multi_reduction <maximumf>, %21, %cst_11 [2] : vector<2x8x8xf32> to vector<2x8xf32>
    %23 = vector.shape_cast %22 : vector<2x8xf32> to vector<2x8x1xf32>
    %24 = vector.broadcast %23 : vector<2x8x1xf32> to vector<2x8x8xf32>
    %25 = arith.subf %21, %24 : vector<2x8x8xf32>
    %26 = math.exp %25 : vector<2x8x8xf32>
    %cst_12 = arith.constant dense<0.000000e+00> : vector<2x8xf32>
    %27 = vector.multi_reduction <add>, %26, %cst_12 [2] : vector<2x8x8xf32> to vector<2x8xf32>
    %28 = vector.shape_cast %27 : vector<2x8xf32> to vector<2x8x1xf32>
    %29 = tpu.reciprocal %28 {approx = true} : vector<2x8x1xf32> -> vector<2x8x1xf32>
    %30 = vector.broadcast %29 : vector<2x8x1xf32> to vector<2x8x8xf32>
    %31 = arith.mulf %26, %30 : vector<2x8x8xf32>
    %c0_13 = arith.constant 0 : index
    %c0_14 = arith.constant 0 : index
    %c0_15 = arith.constant 0 : index
    %32 = vector.load %arg22[%c0_13, %c0_14, %c0_15] : memref<2x8x16xf32, #tpu.memory_space<vmem>>, vector<2x8x8xf32>
    tpu.vector_store %arg22[%c0_13, %c0_14, %c0_15], %31 {strides = array<i32>} : memref<2x8x16xf32, #tpu.memory_space<vmem>>, vector<2x8x8xf32>,
    %33 = arith.truncf %31 : vector<2x8x8xf32> to vector<2x8x8xbf16>
    "tpu.trace_start"() <{level = 10 : i32, message = "bqk,bkd->bqd"}> : () -> ()
    %cst_16 = arith.constant dense<0.000000e+00> : vector<2x8x16xf32>
    %34 = tpu.matmul %33, %17, %cst_16 {dimension_numbers = #tpu.dot_dimension_numbers<[2], [1], [1], [2], [0, 0, 0, 1, 1, 2], [0], [0]>} : vector<2x8x8xbf16>, vector<2x8x16xbf16>, vector<2x8x16xf32> -> vector<2x8x16xf32>
    "tpu.trace_stop"() : () -> ()
    %35 = vector.shape_cast %34 : vector<2x8x16xf32> to vector<16x16xf32>
    %c0_17 = arith.constant 0 : index
    %c0_18 = arith.constant 0 : index
    %36 = vector.load %arg5[%c0_17, %c0_18] : memref<32x32xbf16, #tpu.memory_space<vmem>>, vector<16x32xbf16>
    %37 = arith.truncf %35 : vector<16x16xf32> to vector<16x16xbf16>
    %cst_19 = arith.constant dense<0.000000e+00> : vector<16x32xf32>
    %38 = tpu.matmul %37, %36, %cst_19 {dimension_numbers = #tpu.dot_dimension_numbers<[1], [0], [0], [1], [0, 0, 1, 1], [], []>} : vector<16x16xbf16>, vector<16x32xbf16>, vector<16x32xf32> -> vector<16x32xf32>
    %39 = arith.addf %11, %38 : vector<16x32xf32>
    %40 = vector.extract_strided_slice %9 {offsets = [0, 0, 16], sizes = [2, 8, 16], strides = [1, 1, 1]} : vector<2x8x32xf32> to vector<2x8x16xf32>
    %41 = arith.truncf %40 : vector<2x8x16xf32> to vector<2x8x16xbf16>
    %42 = vector.extract_strided_slice %10 {offsets = [0, 0, 16], sizes = [2, 8, 16], strides = [1, 1, 1]} : vector<2x8x64xf32> to vector<2x8x16xf32>
    %43 = arith.truncf %42 : vector<2x8x16xf32> to vector<2x8x16xbf16>
    %44 = vector.extract_strided_slice %10 {offsets = [0, 0, 48], sizes = [2, 8, 16], strides = [1, 1, 1]} : vector<2x8x64xf32> to vector<2x8x16xf32>
    %45 = arith.truncf %44 : vector<2x8x16xf32> to vector<2x8x16xbf16>
    "tpu.trace_start"() <{level = 10 : i32, message = "bqd,bkd->bqk"}> : () -> ()
    %cst_20 = arith.constant dense<0.000000e+00> : vector<2x8x8xf32>
    %46 = tpu.matmul %41, %43, %cst_20 {dimension_numbers = #tpu.dot_dimension_numbers<[2], [2], [1], [1], [0, 0, 0, 1, 1, 1], [0], [0]>} : vector<2x8x16xbf16>, vector<2x8x16xbf16>, vector<2x8x8xf32> -> vector<2x8x8xf32>
    "tpu.trace_stop"() : () -> ()
    %47 = vector.shape_cast %0 : vector<8x8xf32> to vector<1x8x8xf32>
    %48 = vector.broadcast %47 : vector<1x8x8xf32> to vector<2x8x8xf32>
    %49 = arith.addf %46, %48 : vector<2x8x8xf32>
    %cst_21 = arith.constant dense<0xFF800000> : vector<2x8xf32>
    %50 = vector.multi_reduction <maximumf>, %49, %cst_21 [2] : vector<2x8x8xf32> to vector<2x8xf32>
    %51 = vector.shape_cast %50 : vector<2x8xf32> to vector<2x8x1xf32>
    %52 = vector.broadcast %51 : vector<2x8x1xf32> to vector<2x8x8xf32>
    %53 = arith.subf %49, %52 : vector<2x8x8xf32>
    %54 = math.exp %53 : vector<2x8x8xf32>
    %cst_22 = arith.constant dense<0.000000e+00> : vector<2x8xf32>
    %55 = vector.multi_reduction <add>, %54, %cst_22 [2] : vector<2x8x8xf32> to vector<2x8xf32>
    %56 = vector.shape_cast %55 : vector<2x8xf32> to vector<2x8x1xf32>
    %57 = tpu.reciprocal %56 {approx = true} : vector<2x8x1xf32> -> vector<2x8x1xf32>
    %58 = vector.broadcast %57 : vector<2x8x1xf32> to vector<2x8x8xf32>
    %59 = arith.mulf %54, %58 : vector<2x8x8xf32>
    %c0_23 = arith.constant 0 : index
    %c0_24 = arith.constant 0 : index
    %c8 = arith.constant 8 : index
    %60 = vector.load %arg22[%c0_23, %c0_24, %c8] : memref<2x8x16xf32, #tpu.memory_space<vmem>>, vector<2x8x8xf32>
    tpu.vector_store %arg22[%c0_23, %c0_24, %c8], %59 {strides = array<i32>} : memref<2x8x16xf32, #tpu.memory_space<vmem>>, vector<2x8x8xf32>,
    %61 = arith.truncf %59 : vector<2x8x8xf32> to vector<2x8x8xbf16>
    "tpu.trace_start"() <{level = 10 : i32, message = "bqk,bkd->bqd"}> : () -> ()
    %cst_25 = arith.constant dense<0.000000e+00> : vector<2x8x16xf32>
    %62 = tpu.matmul %61, %45, %cst_25 {dimension_numbers = #tpu.dot_dimension_numbers<[2], [1], [1], [2], [0, 0, 0, 1, 1, 2], [0], [0]>} : vector<2x8x8xbf16>, vector<2x8x16xbf16>, vector<2x8x16xf32> -> vector<2x8x16xf32>
    "tpu.trace_stop"() : () -> ()
    %63 = vector.shape_cast %62 : vector<2x8x16xf32> to vector<16x16xf32>
    %c16 = arith.constant 16 : index
    %c0_26 = arith.constant 0 : index
    %64 = vector.load %arg5[%c16, %c0_26] : memref<32x32xbf16, #tpu.memory_space<vmem>>, vector<16x32xbf16>
    %65 = arith.truncf %63 : vector<16x16xf32> to vector<16x16xbf16>
    %cst_27 = arith.constant dense<0.000000e+00> : vector<16x32xf32>
    %66 = tpu.matmul %65, %64, %cst_27 {dimension_numbers = #tpu.dot_dimension_numbers<[1], [0], [0], [1], [0, 0, 1, 1], [], []>} : vector<16x16xbf16>, vector<16x32xbf16>, vector<16x32xf32> -> vector<16x32xf32>
    %67 = arith.addf %39, %66 : vector<16x32xf32>
    %c0_28 = arith.constant 0 : index
    %c0_29 = arith.constant 0 : index
    %68 = vector.load %arg6[%c0_28, %c0_29] : memref<1x32xf32, #tpu.memory_space<vmem>>, vector<1x32xf32>
    %69 = vector.broadcast %68 : vector<1x32xf32> to vector<16x32xf32>
    %70 = arith.addf %67, %69 : vector<16x32xf32>
    %cst_30 = arith.constant 0.000000e+00 : f32
    %71 = vector.broadcast %cst_30 : f32 to vector<16x32xf32>
    %72 = arith.maximumf %70, %71 : vector<16x32xf32>
    %c0_31 = arith.constant 0 : index
    %c0_32 = arith.constant 0 : index
    %73 = vector.load %arg7[%c0_31, %c0_32] : memref<1x32xf32, #tpu.memory_space<vmem>>, vector<1x32xf32>
    %c0_33 = arith.constant 0 : index
    %c0_34 = arith.constant 0 : index
    %74 = vector.load %arg8[%c0_33, %c0_34] : memref<1x32xf32, #tpu.memory_space<vmem>>, vector<1x32xf32>
    %75 = arith.addf %2, %72 : vector<16x32xf32>
    %cst_35 = arith.constant dense<0.000000e+00> : vector<16xf32>
    %76 = vector.multi_reduction <add>, %75, %cst_35 [1] : vector<16x32xf32> to vector<16xf32>
    %77 = vector.shape_cast %76 : vector<16xf32> to vector<16x1xf32>
    %cst_36 = arith.constant 3.200000e+01 : f32
    %78 = vector.broadcast %cst_36 : f32 to vector<16x1xf32>
    %79 = arith.divf %77, %78 : vector<16x1xf32>
    %80 = vector.broadcast %79 : vector<16x1xf32> to vector<16x32xf32>
    %81 = arith.subf %75, %80 : vector<16x32xf32>
    %82 = arith.mulf %81, %81 : vector<16x32xf32>
    %cst_37 = arith.constant dense<0.000000e+00> : vector<16xf32>
    %83 = vector.multi_reduction <add>, %82, %cst_37 [1] : vector<16x32xf32> to vector<16xf32>
    %84 = vector.shape_cast %83 : vector<16xf32> to vector<16x1xf32>
    %cst_38 = arith.constant 3.200000e+01 : f32
    %85 = vector.broadcast %cst_38 : f32 to vector<16x1xf32>
    %86 = arith.divf %84, %85 : vector<16x1xf32>
    %87 = vector.broadcast %79 : vector<16x1xf32> to vector<16x32xf32>
    %88 = arith.subf %75, %87 : vector<16x32xf32>
    %cst_39 = arith.constant 9.99999974E-6 : f32
    %89 = vector.broadcast %cst_39 : f32 to vector<16x1xf32>
    %90 = arith.addf %86, %89 : vector<16x1xf32>
    %91 = math.rsqrt %90 : vector<16x1xf32>
    %92 = vector.broadcast %91 : vector<16x1xf32> to vector<16x32xf32>
    %93 = arith.mulf %88, %92 : vector<16x32xf32>
    %94 = vector.broadcast %73 : vector<1x32xf32> to vector<16x32xf32>
    %95 = arith.mulf %93, %94 : vector<16x32xf32>
    %96 = vector.broadcast %74 : vector<1x32xf32> to vector<16x32xf32>
    %97 = arith.addf %95, %96 : vector<16x32xf32>
    %c0_40 = arith.constant 0 : index
    %c0_41 = arith.constant 0 : index
    %98 = vector.load %arg9[%c0_40, %c0_41] : memref<32x32xbf16, #tpu.memory_space<vmem>>, vector<32x32xbf16>
    %99 = arith.truncf %97 : vector<16x32xf32> to vector<16x32xbf16>
    %cst_42 = arith.constant dense<0.000000e+00> : vector<16x32xf32>
    %100 = tpu.matmul %99, %98, %cst_42 {dimension_numbers = #tpu.dot_dimension_numbers<[1], [0], [0], [1], [0, 0, 1, 1], [], []>} : vector<16x32xbf16>, vector<32x32xbf16>, vector<16x32xf32> -> vector<16x32xf32>
    %101 = vector.shape_cast %100 : vector<16x32xf32> to vector<2x8x32xf32>
    %c0_43 = arith.constant 0 : index
    %c0_44 = arith.constant 0 : index
    %102 = vector.load %arg10[%c0_43, %c0_44] : memref<32x64xbf16, #tpu.memory_space<vmem>>, vector<32x64xbf16>
    %103 = arith.truncf %4 : vector<16x32xf32> to vector<16x32xbf16>
    %cst_45 = arith.constant dense<0.000000e+00> : vector<16x64xf32>
    %104 = tpu.matmul %103, %102, %cst_45 {dimension_numbers = #tpu.dot_dimension_numbers<[1], [0], [0], [1], [0, 0, 1, 1], [], []>} : vector<16x32xbf16>, vector<32x64xbf16>, vector<16x64xf32> -> vector<16x64xf32>
    %105 = vector.shape_cast %104 : vector<16x64xf32> to vector<2x8x64xf32>
    %cst_46 = arith.constant 0.000000e+00 : f32
    %106 = vector.broadcast %cst_46 : f32 to vector<16x32xf32>
    %107 = vector.extract_strided_slice %101 {offsets = [0, 0, 0], sizes = [2, 8, 16], strides = [1, 1, 1]} : vector<2x8x32xf32> to vector<2x8x16xf32>
    %108 = arith.truncf %107 : vector<2x8x16xf32> to vector<2x8x16xbf16>
    %109 = vector.extract_strided_slice %105 {offsets = [0, 0, 0], sizes = [2, 8, 16], strides = [1, 1, 1]} : vector<2x8x64xf32> to vector<2x8x16xf32>
    %110 = arith.truncf %109 : vector<2x8x16xf32> to vector<2x8x16xbf16>
    %111 = vector.extract_strided_slice %105 {offsets = [0, 0, 32], sizes = [2, 8, 16], strides = [1, 1, 1]} : vector<2x8x64xf32> to vector<2x8x16xf32>
    %112 = arith.truncf %111 : vector<2x8x16xf32> to vector<2x8x16xbf16>
    "tpu.trace_start"() <{level = 10 : i32, message = "bqd,bkd->bqk"}> : () -> ()
    %cst_47 = arith.constant dense<0.000000e+00> : vector<2x8x8xf32>
    %113 = tpu.matmul %108, %110, %cst_47 {dimension_numbers = #tpu.dot_dimension_numbers<[2], [2], [1], [1], [0, 0, 0, 1, 1, 1], [0], [0]>} : vector<2x8x16xbf16>, vector<2x8x16xbf16>, vector<2x8x8xf32> -> vector<2x8x8xf32>
    "tpu.trace_stop"() : () -> ()
    %cst_48 = arith.constant dense<0xFF800000> : vector<2x8xf32>
    %114 = vector.multi_reduction <maximumf>, %113, %cst_48 [2] : vector<2x8x8xf32> to vector<2x8xf32>
    %115 = vector.shape_cast %114 : vector<2x8xf32> to vector<2x8x1xf32>
    %116 = vector.broadcast %115 : vector<2x8x1xf32> to vector<2x8x8xf32>
    %117 = arith.subf %113, %116 : vector<2x8x8xf32>
    %118 = math.exp %117 : vector<2x8x8xf32>
    %cst_49 = arith.constant dense<0.000000e+00> : vector<2x8xf32>
    %119 = vector.multi_reduction <add>, %118, %cst_49 [2] : vector<2x8x8xf32> to vector<2x8xf32>
    %120 = vector.shape_cast %119 : vector<2x8xf32> to vector<2x8x1xf32>
    %121 = tpu.reciprocal %120 {approx = true} : vector<2x8x1xf32> -> vector<2x8x1xf32>
    %122 = vector.broadcast %121 : vector<2x8x1xf32> to vector<2x8x8xf32>
    %123 = arith.mulf %118, %122 : vector<2x8x8xf32>
    %124 = arith.truncf %123 : vector<2x8x8xf32> to vector<2x8x8xbf16>
    "tpu.trace_start"() <{level = 10 : i32, message = "bqk,bkd->bqd"}> : () -> ()
    %cst_50 = arith.constant dense<0.000000e+00> : vector<2x8x16xf32>
    %125 = tpu.matmul %124, %112, %cst_50 {dimension_numbers = #tpu.dot_dimension_numbers<[2], [1], [1], [2], [0, 0, 0, 1, 1, 2], [0], [0]>} : vector<2x8x8xbf16>, vector<2x8x16xbf16>, vector<2x8x16xf32> -> vector<2x8x16xf32>
    "tpu.trace_stop"() : () -> ()
    %126 = vector.shape_cast %125 : vector<2x8x16xf32> to vector<16x16xf32>
    %c0_51 = arith.constant 0 : index
    %c0_52 = arith.constant 0 : index
    %127 = vector.load %arg11[%c0_51, %c0_52] : memref<32x32xbf16, #tpu.memory_space<vmem>>, vector<16x32xbf16>
    %128 = arith.truncf %126 : vector<16x16xf32> to vector<16x16xbf16>
    %cst_53 = arith.constant dense<0.000000e+00> : vector<16x32xf32>
    %129 = tpu.matmul %128, %127, %cst_53 {dimension_numbers = #tpu.dot_dimension_numbers<[1], [0], [0], [1], [0, 0, 1, 1], [], []>} : vector<16x16xbf16>, vector<16x32xbf16>, vector<16x32xf32> -> vector<16x32xf32>
    %130 = arith.addf %106, %129 : vector<16x32xf32>
    %131 = vector.extract_strided_slice %101 {offsets = [0, 0, 16], sizes = [2, 8, 16], strides = [1, 1, 1]} : vector<2x8x32xf32> to vector<2x8x16xf32>
    %132 = arith.truncf %131 : vector<2x8x16xf32> to vector<2x8x16xbf16>
    %133 = vector.extract_strided_slice %105 {offsets = [0, 0, 16], sizes = [2, 8, 16], strides = [1, 1, 1]} : vector<2x8x64xf32> to vector<2x8x16xf32>
    %134 = arith.truncf %133 : vector<2x8x16xf32> to vector<2x8x16xbf16>
    %135 = vector.extract_strided_slice %105 {offsets = [0, 0, 48], sizes = [2, 8, 16], strides = [1, 1, 1]} : vector<2x8x64xf32> to vector<2x8x16xf32>
    %136 = arith.truncf %135 : vector<2x8x16xf32> to vector<2x8x16xbf16>
    "tpu.trace_start"() <{level = 10 : i32, message = "bqd,bkd->bqk"}> : () -> ()
    %cst_54 = arith.constant dense<0.000000e+00> : vector<2x8x8xf32>
    %137 = tpu.matmul %132, %134, %cst_54 {dimension_numbers = #tpu.dot_dimension_numbers<[2], [2], [1], [1], [0, 0, 0, 1, 1, 1], [0], [0]>} : vector<2x8x16xbf16>, vector<2x8x16xbf16>, vector<2x8x8xf32> -> vector<2x8x8xf32>
    "tpu.trace_stop"() : () -> ()
    %cst_55 = arith.constant dense<0xFF800000> : vector<2x8xf32>
    %138 = vector.multi_reduction <maximumf>, %137, %cst_55 [2] : vector<2x8x8xf32> to vector<2x8xf32>
    %139 = vector.shape_cast %138 : vector<2x8xf32> to vector<2x8x1xf32>
    %140 = vector.broadcast %139 : vector<2x8x1xf32> to vector<2x8x8xf32>
    %141 = arith.subf %137, %140 : vector<2x8x8xf32>
    %142 = math.exp %141 : vector<2x8x8xf32>
    %cst_56 = arith.constant dense<0.000000e+00> : vector<2x8xf32>
    %143 = vector.multi_reduction <add>, %142, %cst_56 [2] : vector<2x8x8xf32> to vector<2x8xf32>
    %144 = vector.shape_cast %143 : vector<2x8xf32> to vector<2x8x1xf32>
    %145 = tpu.reciprocal %144 {approx = true} : vector<2x8x1xf32> -> vector<2x8x1xf32>
    %146 = vector.broadcast %145 : vector<2x8x1xf32> to vector<2x8x8xf32>
    %147 = arith.mulf %142, %146 : vector<2x8x8xf32>
    %148 = arith.truncf %147 : vector<2x8x8xf32> to vector<2x8x8xbf16>
    "tpu.trace_start"() <{level = 10 : i32, message = "bqk,bkd->bqd"}> : () -> ()
    %cst_57 = arith.constant dense<0.000000e+00> : vector<2x8x16xf32>
    %149 = tpu.matmul %148, %136, %cst_57 {dimension_numbers = #tpu.dot_dimension_numbers<[2], [1], [1], [2], [0, 0, 0, 1, 1, 2], [0], [0]>} : vector<2x8x8xbf16>, vector<2x8x16xbf16>, vector<2x8x16xf32> -> vector<2x8x16xf32>
    "tpu.trace_stop"() : () -> ()
    %150 = vector.shape_cast %149 : vector<2x8x16xf32> to vector<16x16xf32>
    %c16_58 = arith.constant 16 : index
    %c0_59 = arith.constant 0 : index
    %151 = vector.load %arg11[%c16_58, %c0_59] : memref<32x32xbf16, #tpu.memory_space<vmem>>, vector<16x32xbf16>
    %152 = arith.truncf %150 : vector<16x16xf32> to vector<16x16xbf16>
    %cst_60 = arith.constant dense<0.000000e+00> : vector<16x32xf32>
    %153 = tpu.matmul %152, %151, %cst_60 {dimension_numbers = #tpu.dot_dimension_numbers<[1], [0], [0], [1], [0, 0, 1, 1], [], []>} : vector<16x16xbf16>, vector<16x32xbf16>, vector<16x32xf32> -> vector<16x32xf32>
    %154 = arith.addf %130, %153 : vector<16x32xf32>
    %c0_61 = arith.constant 0 : index
    %c0_62 = arith.constant 0 : index
    %155 = vector.load %arg12[%c0_61, %c0_62] : memref<1x32xf32, #tpu.memory_space<vmem>>, vector<1x32xf32>
    %156 = vector.broadcast %155 : vector<1x32xf32> to vector<16x32xf32>
    %157 = arith.addf %154, %156 : vector<16x32xf32>
    %cst_63 = arith.constant 0.000000e+00 : f32
    %158 = vector.broadcast %cst_63 : f32 to vector<16x32xf32>
    %159 = arith.maximumf %157, %158 : vector<16x32xf32>
    %c0_64 = arith.constant 0 : index
    %c0_65 = arith.constant 0 : index
    %160 = vector.load %arg13[%c0_64, %c0_65] : memref<1x32xf32, #tpu.memory_space<vmem>>, vector<1x32xf32>
    %c0_66 = arith.constant 0 : index
    %c0_67 = arith.constant 0 : index
    %161 = vector.load %arg14[%c0_66, %c0_67] : memref<1x32xf32, #tpu.memory_space<vmem>>, vector<1x32xf32>
    %162 = arith.addf %97, %159 : vector<16x32xf32>
    %cst_68 = arith.constant dense<0.000000e+00> : vector<16xf32>
    %163 = vector.multi_reduction <add>, %162, %cst_68 [1] : vector<16x32xf32> to vector<16xf32>
    %164 = vector.shape_cast %163 : vector<16xf32> to vector<16x1xf32>
    %cst_69 = arith.constant 3.200000e+01 : f32
    %165 = vector.broadcast %cst_69 : f32 to vector<16x1xf32>
    %166 = arith.divf %164, %165 : vector<16x1xf32>
    %167 = vector.broadcast %166 : vector<16x1xf32> to vector<16x32xf32>
    %168 = arith.subf %162, %167 : vector<16x32xf32>
    %169 = arith.mulf %168, %168 : vector<16x32xf32>
    %cst_70 = arith.constant dense<0.000000e+00> : vector<16xf32>
    %170 = vector.multi_reduction <add>, %169, %cst_70 [1] : vector<16x32xf32> to vector<16xf32>
    %171 = vector.shape_cast %170 : vector<16xf32> to vector<16x1xf32>
    %cst_71 = arith.constant 3.200000e+01 : f32
    %172 = vector.broadcast %cst_71 : f32 to vector<16x1xf32>
    %173 = arith.divf %171, %172 : vector<16x1xf32>
    %174 = vector.broadcast %166 : vector<16x1xf32> to vector<16x32xf32>
    %175 = arith.subf %162, %174 : vector<16x32xf32>
    %cst_72 = arith.constant 9.99999974E-6 : f32
    %176 = vector.broadcast %cst_72 : f32 to vector<16x1xf32>
    %177 = arith.addf %173, %176 : vector<16x1xf32>
    %178 = math.rsqrt %177 : vector<16x1xf32>
    %179 = vector.broadcast %178 : vector<16x1xf32> to vector<16x32xf32>
    %180 = arith.mulf %175, %179 : vector<16x32xf32>
    %181 = vector.broadcast %160 : vector<1x32xf32> to vector<16x32xf32>
    %182 = arith.mulf %180, %181 : vector<16x32xf32>
    %183 = vector.broadcast %161 : vector<1x32xf32> to vector<16x32xf32>
    %184 = arith.addf %182, %183 : vector<16x32xf32>
    %c0_73 = arith.constant 0 : index
    %c0_74 = arith.constant 0 : index
    %185 = vector.load %arg15[%c0_73, %c0_74] : memref<32x64xbf16, #tpu.memory_space<vmem>>, vector<32x64xbf16>
    %186 = arith.truncf %184 : vector<16x32xf32> to vector<16x32xbf16>
    %cst_75 = arith.constant dense<0.000000e+00> : vector<16x64xf32>
    %187 = tpu.matmul %186, %185, %cst_75 {dimension_numbers = #tpu.dot_dimension_numbers<[1], [0], [0], [1], [0, 0, 1, 1], [], []>} : vector<16x32xbf16>, vector<32x64xbf16>, vector<16x64xf32> -> vector<16x64xf32>
    %c0_76 = arith.constant 0 : index
    %c0_77 = arith.constant 0 : index
    %188 = vector.load %arg16[%c0_76, %c0_77] : memref<1x64xf32, #tpu.memory_space<vmem>>, vector<1x64xf32>
    %189 = vector.broadcast %188 : vector<1x64xf32> to vector<16x64xf32>
    %190 = arith.addf %187, %189 : vector<16x64xf32>
    %191 = arith.mulf %190, %190 : vector<16x64xf32>
    %192 = arith.mulf %190, %191 : vector<16x64xf32>
    %cst_78 = arith.constant 4.471500e-02 : f32
    %193 = vector.broadcast %cst_78 : f32 to vector<16x64xf32>
    %194 = arith.mulf %193, %192 : vector<16x64xf32>
    %195 = arith.addf %190, %194 : vector<16x64xf32>
    %cst_79 = arith.constant 0.797884583 : f32
    %196 = vector.broadcast %cst_79 : f32 to vector<16x64xf32>
    %197 = arith.mulf %196, %195 : vector<16x64xf32>
    %198 = math.tanh %197 : vector<16x64xf32>
    %cst_80 = arith.constant 1.000000e+00 : f32
    %199 = vector.broadcast %cst_80 : f32 to vector<16x64xf32>
    %200 = arith.addf %199, %198 : vector<16x64xf32>
    %cst_81 = arith.constant 5.000000e-01 : f32
    %201 = vector.broadcast %cst_81 : f32 to vector<16x64xf32>
    %202 = arith.mulf %201, %200 : vector<16x64xf32>
    %203 = arith.mulf %190, %202 : vector<16x64xf32>
    %c0_82 = arith.constant 0 : index
    %c0_83 = arith.constant 0 : index
    %204 = vector.load %arg17[%c0_82, %c0_83] : memref<64x32xbf16, #tpu.memory_space<vmem>>, vector<64x32xbf16>
    %205 = arith.truncf %203 : vector<16x64xf32> to vector<16x64xbf16>
    %cst_84 = arith.constant dense<0.000000e+00> : vector<16x32xf32>
    %206 = tpu.matmul %205, %204, %cst_84 {dimension_numbers = #tpu.dot_dimension_numbers<[1], [0], [0], [1], [0, 0, 1, 1], [], []>} : vector<16x64xbf16>, vector<64x32xbf16>, vector<16x32xf32> -> vector<16x32xf32>
    %c0_85 = arith.constant 0 : index
    %c0_86 = arith.constant 0 : index
    %207 = vector.load %arg18[%c0_85, %c0_86] : memref<1x32xf32, #tpu.memory_space<vmem>>, vector<1x32xf32>
    %208 = vector.broadcast %207 : vector<1x32xf32> to vector<16x32xf32>
    %209 = arith.addf %206, %208 : vector<16x32xf32>
    %c0_87 = arith.constant 0 : index
    %c0_88 = arith.constant 0 : index
    %210 = vector.load %arg19[%c0_87, %c0_88] : memref<1x32xf32, #tpu.memory_space<vmem>>, vector<1x32xf32>
    %c0_89 = arith.constant 0 : index
    %c0_90 = arith.constant 0 : index
    %211 = vector.load %arg20[%c0_89, %c0_90] : memref<1x32xf32, #tpu.memory_space<vmem>>, vector<1x32xf32>
    %212 = arith.addf %184, %209 : vector<16x32xf32>
    %cst_91 = arith.constant dense<0.000000e+00> : vector<16xf32>
    %213 = vector.multi_reduction <add>, %212, %cst_91 [1] : vector<16x32xf32> to vector<16xf32>
    %214 = vector.shape_cast %213 : vector<16xf32> to vector<16x1xf32>
    %cst_92 = arith.constant 3.200000e+01 : f32
    %215 = vector.broadcast %cst_92 : f32 to vector<16x1xf32>
    %216 = arith.divf %214, %215 : vector<16x1xf32>
    %217 = vector.broadcast %216 : vector<16x1xf32> to vector<16x32xf32>
    %218 = arith.subf %212, %217 : vector<16x32xf32>
    %219 = arith.mulf %218, %218 : vector<16x32xf32>
    %cst_93 = arith.constant dense<0.000000e+00> : vector<16xf32>
    %220 = vector.multi_reduction <add>, %219, %cst_93 [1] : vector<16x32xf32> to vector<16xf32>
    %221 = vector.shape_cast %220 : vector<16xf32> to vector<16x1xf32>
    %cst_94 = arith.constant 3.200000e+01 : f32
    %222 = vector.broadcast %cst_94 : f32 to vector<16x1xf32>
    %223 = arith.divf %221, %222 : vector<16x1xf32>
    %224 = vector.broadcast %216 : vector<16x1xf32> to vector<16x32xf32>
    %225 = arith.subf %212, %224 : vector<16x32xf32>
    %cst_95 = arith.constant 9.99999974E-6 : f32
    %226 = vector.broadcast %cst_95 : f32 to vector<16x1xf32>
    %227 = arith.addf %223, %226 : vector<16x1xf32>
    %228 = math.rsqrt %227 : vector<16x1xf32>
    %229 = vector.broadcast %228 : vector<16x1xf32> to vector<16x32xf32>
    %230 = arith.mulf %225, %229 : vector<16x32xf32>
    %231 = vector.broadcast %210 : vector<1x32xf32> to vector<16x32xf32>
    %232 = arith.mulf %230, %231 : vector<16x32xf32>
    %233 = vector.broadcast %211 : vector<1x32xf32> to vector<16x32xf32>
    %234 = arith.addf %232, %233 : vector<16x32xf32>
    %235 = vector.shape_cast %234 : vector<16x32xf32> to vector<2x8x32xf32>
    %c0_96 = arith.constant 0 : index
    %c0_97 = arith.constant 0 : index
    %c0_98 = arith.constant 0 : index
    %236 = vector.load %arg21[%c0_96, %c0_97, %c0_98] : memref<2x8x32xf32, #tpu.memory_space<vmem>>, vector<2x8x32xf32>
    tpu.vector_store %arg21[%c0_96, %c0_97, %c0_98], %235 {strides = array<i32>} : memref<2x8x32xf32, #tpu.memory_space<vmem>>, vector<2x8x32xf32>,
    return
  }
  func.func @transform_0(%arg0: i32) -> (i32, i32, i32) {
    %c0_i32 = arith.constant 0 : i32
    %c0_i32_0 = arith.constant 0 : i32
    %c0_i32_1 = arith.constant 0 : i32
    return %arg0, %c0_i32, %c0_i32_0 : i32, i32, i32
  }
  func.func @transform_1(%arg0: i32) -> (i32, i32, i32) {
    %c0_i32 = arith.constant 0 : i32
    %c0_i32_0 = arith.constant 0 : i32
    %c0_i32_1 = arith.constant 0 : i32
    return %arg0, %c0_i32, %c0_i32_0 : i32, i32, i32
  }
  func.func @transform_2(%arg0: i32) -> (i32, i32) {
    %c0_i32 = arith.constant 0 : i32
    %c0_i32_0 = arith.constant 0 : i32
    %c0_i32_1 = arith.constant 0 : i32
    return %c0_i32, %c0_i32_0 : i32, i32
  }
  func.func @transform_3(%arg0: i32) -> (i32, i32) {
    %c0_i32 = arith.constant 0 : i32
    %c0_i32_0 = arith.constant 0 : i32
    %c0_i32_1 = arith.constant 0 : i32
    return %c0_i32, %c0_i32_0 : i32, i32
  }
  func.func @transform_4(%arg0: i32) -> (i32, i32) {
    %c0_i32 = arith.constant 0 : i32
    %c0_i32_0 = arith.constant 0 : i32
    %c0_i32_1 = arith.constant 0 : i32
    return %c0_i32, %c0_i32_0 : i32, i32
  }
  func.func @transform_5(%arg0: i32) -> (i32, i32) {
    %c0_i32 = arith.constant 0 : i32
    %c0_i32_0 = arith.constant 0 : i32
    %c0_i32_1 = arith.constant 0 : i32
    return %c0_i32, %c0_i32_0 : i32, i32
  }
  func.func @transform_6(%arg0: i32) -> (i32, i32) {
    %c0_i32 = arith.constant 0 : i32
    %c0_i32_0 = arith.constant 0 : i32
    %c0_i32_1 = arith.constant 0 : i32
    return %c0_i32, %c0_i32_0 : i32, i32
  }
  func.func @transform_7(%arg0: i32) -> (i32, i32) {
    %c0_i32 = arith.constant 0 : i32
    %c0_i32_0 = arith.constant 0 : i32
    %c0_i32_1 = arith.constant 0 : i32
    return %c0_i32, %c0_i32_0 : i32, i32
  }
  func.func @transform_8(%arg0: i32) -> (i32, i32) {
    %c0_i32 = arith.constant 0 : i32
    %c0_i32_0 = arith.constant 0 : i32
    %c0_i32_1 = arith.constant 0 : i32
    return %c0_i32, %c0_i32_0 : i32, i32
  }
  func.func @transform_9(%arg0: i32) -> (i32, i32) {
    %c0_i32 = arith.constant 0 : i32
    %c0_i32_0 = arith.constant 0 : i32
    %c0_i32_1 = arith.constant 0 : i32
    return %c0_i32, %c0_i32_0 : i32, i32
  }
  func.func @transform_10(%arg0: i32) -> (i32, i32) {
    %c0_i32 = arith.constant 0 : i32
    %c0_i32_0 = arith.constant 0 : i32
    %c0_i32_1 = arith.constant 0 : i32
    return %c0_i32, %c0_i32_0 : i32, i32
  }
  func.func @transform_11(%arg0: i32) -> (i32, i32) {
    %c0_i32 = arith.constant 0 : i32
    %c0_i32_0 = arith.constant 0 : i32
    %c0_i32_1 = arith.constant 0 : i32
    return %c0_i32, %c0_i32_0 : i32, i32
  }
  func.func @transform_12(%arg0: i32) -> (i32, i32) {
    %c0_i32 = arith.constant 0 : i32
    %c0_i32_0 = arith.constant 0 : i32
    %c0_i32_1 = arith.constant 0 : i32
    return %c0_i32, %c0_i32_0 : i32, i32
  }
  func.func @transform_13(%arg0: i32) -> (i32, i32) {
    %c0_i32 = arith.constant 0 : i32
    %c0_i32_0 = arith.constant 0 : i32
    %c0_i32_1 = arith.constant 0 : i32
    return %c0_i32, %c0_i32_0 : i32, i32
  }
  func.func @transform_14(%arg0: i32) -> (i32, i32) {
    %c0_i32 = arith.constant 0 : i32
    %c0_i32_0 = arith.constant 0 : i32
    %c0_i32_1 = arith.constant 0 : i32
    return %c0_i32, %c0_i32_0 : i32, i32
  }
  func.func @transform_15(%arg0: i32) -> (i32, i32) {
    %c0_i32 = arith.constant 0 : i32
    %c0_i32_0 = arith.constant 0 : i32
    %c0_i32_1 = arith.constant 0 : i32
    return %c0_i32, %c0_i32_0 : i32, i32
  }
  func.func @transform_16(%arg0: i32) -> (i32, i32) {
    %c0_i32 = arith.constant 0 : i32
    %c0_i32_0 = arith.constant 0 : i32
    %c0_i32_1 = arith.constant 0 : i32
    return %c0_i32, %c0_i32_0 : i32, i32
  }
  func.func @transform_17(%arg0: i32) -> (i32, i32) {
    %c0_i32 = arith.constant 0 : i32
    %c0_i32_0 = arith.constant 0 : i32
    %c0_i32_1 = arith.constant 0 : i32
    return %c0_i32, %c0_i32_0 : i32, i32
  }
  func.func @transform_18(%arg0: i32) -> (i32, i32) {
    %c0_i32 = arith.constant 0 : i32
    %c0_i32_0 = arith.constant 0 : i32
    %c0_i32_1 = arith.constant 0 : i32
    return %c0_i32, %c0_i32_0 : i32, i32
  }
  func.func @transform_19(%arg0: i32) -> (i32, i32) {
    %c0_i32 = arith.constant 0 : i32
    %c0_i32_0 = arith.constant 0 : i32
    %c0_i32_1 = arith.constant 0 : i32
    return %c0_i32, %c0_i32_0 : i32, i32
  }
  func.func @transform_20(%arg0: i32) -> (i32, i32, i32) {
    %c0_i32 = arith.constant 0 : i32
    %c0_i32_0 = arith.constant 0 : i32
    %c0_i32_1 = arith.constant 0 : i32
    return %arg0, %c0_i32, %c0_i32_0 : i32, i32, i32
  }
  func.func @transform_21(%arg0: i32) -> (i32, i32, i32) {
    %c0_i32 = arith.constant 0 : i32
    %c0_i32_0 = arith.constant 0 : i32
    %c0_i32_1 = arith.constant 0 : i32
    return %arg0, %c0_i32, %c0_i32_0 : i32, i32, i32
  }
}

</mosaic_0001>

<llo_original>
// kernel: tpu_custom_call.1
$region0: #{tpu_custom_call.1}
  #allocation0 [shape = 'u32[]', space=smem, size = 0x4, offset = 0x4, fixed_abs, tag = 'smem constant byte address 0x4 - core index']
  #allocation1 [shape = 'u32[144,128]{1,0:T(1,128)}', space=vmem, size = 0x12000, scoped, tag = 'internal scratch']
  %s0 = inlined_call_operand.vmem [shape: f32[2,8,32], index: 0, kind: input, shape index: {}]
  %s1 = inlined_call_operand.vmem [shape: f32[2,8,32], index: 1, kind: input, shape index: {}]
  %s2 = inlined_call_operand.hbm [shape: f32[8,8], index: 2, kind: input, shape index: {}]
  %s3 = inlined_call_operand.vmem [shape: bf16[32,96], index: 3, kind: input, shape index: {}]
  %s4 = inlined_call_operand.hbm [shape: bf16[32,32], index: 4, kind: input, shape index: {}]
  %s5 = inlined_call_operand.vmem [shape: f32[1,32], index: 5, kind: input, shape index: {}]
  %s6 = inlined_call_operand.hbm [shape: f32[1,32], index: 6, kind: input, shape index: {}]
  %s7 = inlined_call_operand.hbm [shape: f32[1,32], index: 7, kind: input, shape index: {}]
  %s8 = inlined_call_operand.hbm [shape: bf16[32,32], index: 8, kind: input, shape index: {}]
  %s9 = inlined_call_operand.vmem [shape: bf16[32,64], index: 9, kind: input, shape index: {}]
  %s10 = inlined_call_operand.hbm [shape: bf16[32,32], index: 10, kind: input, shape index: {}]
  %s11 = inlined_call_operand.hbm [shape: f32[1,32], index: 11, kind: input, shape index: {}]
  %s12 = inlined_call_operand.hbm [shape: f32[1,32], index: 12, kind: input, shape index: {}]
  %s13 = inlined_call_operand.hbm [shape: f32[1,32], index: 13, kind: input, shape index: {}]
  %s14 = inlined_call_operand.vmem [shape: bf16[32,64], index: 14, kind: input, shape index: {}]
  %s15 = inlined_call_operand.vmem [shape: f32[1,64], index: 15, kind: input, shape index: {}]
  %s16 = inlined_call_operand.vmem [shape: bf16[64,32], index: 16, kind: input, shape index: {}]
  %s17 = inlined_call_operand.vmem [shape: f32[1,32], index: 17, kind: input, shape index: {}]
  %s18 = inlined_call_operand.vmem [shape: f32[1,32], index: 18, kind: input, shape index: {}]
  %s19 = inlined_call_operand.vmem [shape: f32[1,32], index: 19, kind: input, shape index: {}]
  %s20 = inlined_call_operand.hbm [shape: f32[2,8,32], index: 20, kind: output, shape index: {0}]
  %s21 = inlined_call_operand.hbm [shape: f32[2,8,16], index: 21, kind: output, shape index: {1}]
  %22 = xla_tuple %s20, %s21
  %s23 = sld [smem:[#allocation0]]
  $region134: #{tpu_custom_call.1} parent=0
    _
  %s25 = ssub.s32 1, %s23
  %s26 = scalar_select 0, %s25, %s23
  $region1: #{tpu_custom_call.1} parent=0
    #allocation2 [shape = 'u8[4096]{0}', space=vmem, size = 0x1000, scoped, tag = 'input window, operand 2, single buffered']
    #allocation3 [shape = 's32[1]{0}', space=sflag, size = 0x4, scoped, tag = 'scoped memory for tpu_custom_call.1']
    #allocation4 [shape = 's32[1]{0}', space=sflag, size = 0x4, scoped, tag = 'scoped memory for tpu_custom_call.1']
    #allocation5 [shape = 'u8[8192]{0}', space=vmem, size = 0x2000, scoped, tag = 'input window, operand 4, single buffered']
    #allocation6 [shape = 's32[1]{0}', space=sflag, size = 0x4, scoped, tag = 'scoped memory for tpu_custom_call.1']
    #allocation7 [shape = 'u8[512]{0}', space=vmem, size = 0x400, scoped, tag = 'input window, operand 6, single buffered']
    #allocation8 [shape = 'u8[512]{0}', space=vmem, size = 0x400, scoped, tag = 'input window, operand 7, single buffered']
    #allocation9 [shape = 's32[1]{0}', space=sflag, size = 0x4, scoped, tag = 'scoped memory for tpu_custom_call.1']
    #allocation10 [shape = 'u8[8192]{0}', space=vmem, size = 0x2000, scoped, tag = 'input window, operand 8, single buffered']
    #allocation11 [shape = 'u8[8192]{0}', space=vmem, size = 0x2000, scoped, tag = 'input window, operand 10, single buffered']
    #allocation12 [shape = 's32[1]{0}', space=sflag, size = 0x4, scoped, tag = 'scoped memory for tpu_custom_call.1']
    #allocation13 [shape = 'u8[512]{0}', space=vmem, size = 0x400, scoped, tag = 'input window, operand 11, single buffered']
    #allocation14 [shape = 'u8[512]{0}', space=vmem, size = 0x400, scoped, tag = 'input window, operand 12, single buffered']
    #allocation15 [shape = 's32[1]{0}', space=sflag, size = 0x4, scoped, tag = 'scoped memory for tpu_custom_call.1']
    #allocation16 [shape = 'u8[512]{0}', space=vmem, size = 0x400, scoped, tag = 'input window, operand 13, single buffered']
    #allocation17 [shape = 'u8[8192]{0}', space=vmem, size = 0x2000, scoped, tag = 'output window, operand 0, single buffered']
    #allocation18 [shape = 'u8[8192]{0}', space=vmem, size = 0x2000, scoped, tag = 'output window, operand 1, single buffered']
    #allocation19 [shape = 's32[1]{0}', space=sflag, size = 0x4, scoped, tag = 'scoped memory for tpu_custom_call.1']
    %27 = vsyncpa [#allocation3], 0
    %28 = vsyncpa [#allocation6], 0
    %29 = vsyncpa [#allocation9], 0
    %30 = vsyncpa [#allocation12], 0
    %31 = vsyncpa [#allocation15], 0
    %32 = vsyncpa [#allocation4], 0
    %33 = vsyncpa [#allocation19], 0
    // Predicated region
    $region2: #{tpu_custom_call.1} parent=1 // pred_check
      _
    $region3: #{tpu_custom_call.1} parent=1 // pred_check_branch
      %35 = sbr.rel (0) target = $region5
    $region4: #{tpu_custom_call.1} parent=1 // pred_region
      _
    $region5: #{tpu_custom_call.1} parent=1 // pred_fallthru
      _
    // Predicated region
    $region6: #{tpu_custom_call.1} parent=1 // pred_check
      _
    $region7: #{tpu_custom_call.1} parent=1 // pred_check_branch
      %37 = sbr.rel (0) target = $region9
    $region8: #{tpu_custom_call.1} parent=1 // pred_region
      _
    $region9: #{tpu_custom_call.1} parent=1 // pred_fallthru
      _
    // Predicated region
    $region10: #{tpu_custom_call.1} parent=1 // pred_check
      _
    $region11: #{tpu_custom_call.1} parent=1 // pred_check_branch
      %39 = sbr.rel (0) target = $region13
    $region12: #{tpu_custom_call.1} parent=1 // pred_region
      %s41 = ssub.s32 128, 128
      %42 = vsyncadd [#allocation3], %s41
      %s44 = sshll.u32 [#allocation2], 4
      %s45 = int_to_ptr.vmem [resolvable:$true] %s44
      %47 = dma.hbm_to_vmem [thread:$0]  %s2, 128, %s45, [#allocation3]
    $region13: #{tpu_custom_call.1} parent=1 // pred_fallthru
      _
    // Predicated region
    $region14: #{tpu_custom_call.1} parent=1 // pred_check
      _
    $region15: #{tpu_custom_call.1} parent=1 // pred_check_branch
      %49 = sbr.rel (0) target = $region17
    $region16: #{tpu_custom_call.1} parent=1 // pred_region
      _
    $region17: #{tpu_custom_call.1} parent=1 // pred_fallthru
      _
    // Predicated region
    $region18: #{tpu_custom_call.1} parent=1 // pred_check
      _
    $region19: #{tpu_custom_call.1} parent=1 // pred_check_branch
      %51 = sbr.rel (0) target = $region21
    $region20: #{tpu_custom_call.1} parent=1 // pred_region
      %s53 = ssub.s32 256, 256
      %54 = vsyncadd [#allocation6], %s53
      %s55 = sshll.u32 [#allocation5], 4
      %s56 = int_to_ptr.vmem [resolvable:$true] %s55
      %61 = dma.hbm_to_vmem [thread:$0]  %s4, 256, %s56, [#allocation6], 64, 64, 4
    $region21: #{tpu_custom_call.1} parent=1 // pred_fallthru
      _
    // Predicated region
    $region22: #{tpu_custom_call.1} parent=1 // pred_check
      _
    $region23: #{tpu_custom_call.1} parent=1 // pred_check_branch
      %63 = sbr.rel (0) target = $region25
    $region24: #{tpu_custom_call.1} parent=1 // pred_region
      _
    $region25: #{tpu_custom_call.1} parent=1 // pred_fallthru
      _
    // Predicated region
    $region26: #{tpu_custom_call.1} parent=1 // pred_check
      _
    $region27: #{tpu_custom_call.1} parent=1 // pred_check_branch
      %65 = sbr.rel (0) target = $region29
    $region28: #{tpu_custom_call.1} parent=1 // pred_region
      %s67 = ssub.s32 16, 16
      %68 = vsyncadd [#allocation6], %s67
      %s70 = sshll.u32 [#allocation7], 4
      %s71 = int_to_ptr.vmem [resolvable:$true] %s70
      %73 = dma.hbm_to_vmem [thread:$0]  %s6, 16, %s71, [#allocation6]
    $region29: #{tpu_custom_call.1} parent=1 // pred_fallthru
      _
    // Predicated region
    $region30: #{tpu_custom_call.1} parent=1 // pred_check
      _
    $region31: #{tpu_custom_call.1} parent=1 // pred_check_branch
      %75 = sbr.rel (0) target = $region33
    $region32: #{tpu_custom_call.1} parent=1 // pred_region
      %s77 = ssub.s32 16, 16
      %78 = vsyncadd [#allocation9], %s77
      %s80 = sshll.u32 [#allocation8], 4
      %s81 = int_to_ptr.vmem [resolvable:$true] %s80
      %83 = dma.hbm_to_vmem [thread:$0]  %s7, 16, %s81, [#allocation9]
    $region33: #{tpu_custom_call.1} parent=1 // pred_fallthru
      _
    // Predicated region
    $region34: #{tpu_custom_call.1} parent=1 // pred_check
      _
    $region35: #{tpu_custom_call.1} parent=1 // pred_check_branch
      %85 = sbr.rel (0) target = $region37
    $region36: #{tpu_custom_call.1} parent=1 // pred_region
      %s87 = ssub.s32 256, 256
      %88 = vsyncadd [#allocation9], %s87
      %s89 = sshll.u32 [#allocation10], 4
      %s90 = int_to_ptr.vmem [resolvable:$true] %s89
      %95 = dma.hbm_to_vmem [thread:$0]  %s8, 256, %s90, [#allocation9], 64, 64, 4
    $region37: #{tpu_custom_call.1} parent=1 // pred_fallthru
      _
    // Predicated region
    $region38: #{tpu_custom_call.1} parent=1 // pred_check
      _
    $region39: #{tpu_custom_call.1} parent=1 // pred_check_branch
      %97 = sbr.rel (0) target = $region41
    $region40: #{tpu_custom_call.1} parent=1 // pred_region
      _
    $region41: #{tpu_custom_call.1} parent=1 // pred_fallthru
      _
    // Predicated region
    $region42: #{tpu_custom_call.1} parent=1 // pred_check
      _
    $region43: #{tpu_custom_call.1} parent=1 // pred_check_branch
      %99 = sbr.rel (0) target = $region45
    $region44: #{tpu_custom_call.1} parent=1 // pred_region
      %s101 = ssub.s32 256, 256
      %102 = vsyncadd [#allocation12], %s101
      %s103 = sshll.u32 [#allocation11], 4
      %s104 = int_to_ptr.vmem [resolvable:$true] %s103
      %109 = dma.hbm_to_vmem [thread:$0]  %s10, 256, %s104, [#allocation12], 64, 64, 4
    $region45: #{tpu_custom_call.1} parent=1 // pred_fallthru
      _
    // Predicated region
    $region46: #{tpu_custom_call.1} parent=1 // pred_check
      _
    $region47: #{tpu_custom_call.1} parent=1 // pred_check_branch
      %111 = sbr.rel (0) target = $region49
    $region48: #{tpu_custom_call.1} parent=1 // pred_region
      %s113 = ssub.s32 16, 16
      %114 = vsyncadd [#allocation12], %s113
      %s116 = sshll.u32 [#allocation13], 4
      %s117 = int_to_ptr.vmem [resolvable:$true] %s116
      %119 = dma.hbm_to_vmem [thread:$0]  %s11, 16, %s117, [#allocation12]
    $region49: #{tpu_custom_call.1} parent=1 // pred_fallthru
      _
    // Predicated region
    $region50: #{tpu_custom_call.1} parent=1 // pred_check
      _
    $region51: #{tpu_custom_call.1} parent=1 // pred_check_branch
      %121 = sbr.rel (0) target = $region53
    $region52: #{tpu_custom_call.1} parent=1 // pred_region
      %s123 = ssub.s32 16, 16
      %124 = vsyncadd [#allocation15], %s123
      %s126 = sshll.u32 [#allocation14], 4
      %s127 = int_to_ptr.vmem [resolvable:$true] %s126
      %129 = dma.hbm_to_vmem [thread:$0]  %s12, 16, %s127, [#allocation15]
    $region53: #{tpu_custom_call.1} parent=1 // pred_fallthru
      _
    // Predicated region
    $region54: #{tpu_custom_call.1} parent=1 // pred_check
      _
    $region55: #{tpu_custom_call.1} parent=1 // pred_check_branch
      %131 = sbr.rel (0) target = $region57
    $region56: #{tpu_custom_call.1} parent=1 // pred_region
      %s133 = ssub.s32 16, 16
      %134 = vsyncadd [#allocation15], %s133
      %s136 = sshll.u32 [#allocation16], 4
      %s137 = int_to_ptr.vmem [resolvable:$true] %s136
      %139 = dma.hbm_to_vmem [thread:$0]  %s13, 16, %s137, [#allocation15]
    $region57: #{tpu_custom_call.1} parent=1 // pred_fallthru
      _
    // Predicated region
    $region58: #{tpu_custom_call.1} parent=1 // pred_check
      _
    $region59: #{tpu_custom_call.1} parent=1 // pred_check_branch
      %141 = sbr.rel (0) target = $region61
    $region60: #{tpu_custom_call.1} parent=1 // pred_region
      _
    $region61: #{tpu_custom_call.1} parent=1 // pred_fallthru
      _
    // Predicated region
    $region62: #{tpu_custom_call.1} parent=1 // pred_check
      _
    $region63: #{tpu_custom_call.1} parent=1 // pred_check_branch
      %143 = sbr.rel (0) target = $region65
    $region64: #{tpu_custom_call.1} parent=1 // pred_region
      _
    $region65: #{tpu_custom_call.1} parent=1 // pred_fallthru
      _
    // Predicated region
    $region66: #{tpu_custom_call.1} parent=1 // pred_check
      _
    $region67: #{tpu_custom_call.1} parent=1 // pred_check_branch
      %145 = sbr.rel (0) target = $region69
    $region68: #{tpu_custom_call.1} parent=1 // pred_region
      _
    $region69: #{tpu_custom_call.1} parent=1 // pred_fallthru
      _
    // Predicated region
    $region70: #{tpu_custom_call.1} parent=1 // pred_check
      _
    $region71: #{tpu_custom_call.1} parent=1 // pred_check_branch
      %147 = sbr.rel (0) target = $region73
    $region72: #{tpu_custom_call.1} parent=1 // pred_region
      _
    $region73: #{tpu_custom_call.1} parent=1 // pred_fallthru
      _
    // Predicated region
    $region74: #{tpu_custom_call.1} parent=1 // pred_check
      _
    $region75: #{tpu_custom_call.1} parent=1 // pred_check_branch
      %149 = sbr.rel (0) target = $region77
    $region76: #{tpu_custom_call.1} parent=1 // pred_region
      _
    $region77: #{tpu_custom_call.1} parent=1 // pred_fallthru
      _
    // Predicated region
    $region78: #{tpu_custom_call.1} parent=1 // pred_check
      _
    $region79: #{tpu_custom_call.1} parent=1 // pred_check_branch
      %151 = sbr.rel (0) target = $region81
    $region80: #{tpu_custom_call.1} parent=1 // pred_region
      _
    $region81: #{tpu_custom_call.1} parent=1 // pred_fallthru
      _
    // Predicated region
    $region82: #{tpu_custom_call.1} parent=1 // pred_check
      _
    $region83: #{tpu_custom_call.1} parent=1 // pred_check_branch
      %153 = sbr.rel (0) target = $region85
    $region84: #{tpu_custom_call.1} parent=1 // pred_region
      %154 = dma.done [#allocation3], 128
    $region85: #{tpu_custom_call.1} parent=1 // pred_fallthru
      _
    // Predicated region
    $region86: #{tpu_custom_call.1} parent=1 // pred_check
      _
    $region87: #{tpu_custom_call.1} parent=1 // pred_check_branch
      %156 = sbr.rel (0) target = $region89
    $region88: #{tpu_custom_call.1} parent=1 // pred_region
      %157 = dma.done [#allocation6], 256
    $region89: #{tpu_custom_call.1} parent=1 // pred_fallthru
      _
    // Predicated region
    $region90: #{tpu_custom_call.1} parent=1 // pred_check
      _
    $region91: #{tpu_custom_call.1} parent=1 // pred_check_branch
      %159 = sbr.rel (0) target = $region93
    $region92: #{tpu_custom_call.1} parent=1 // pred_region
      %160 = dma.done [#allocation6], 16
    $region93: #{tpu_custom_call.1} parent=1 // pred_fallthru
      _
    // Predicated region
    $region94: #{tpu_custom_call.1} parent=1 // pred_check
      _
    $region95: #{tpu_custom_call.1} parent=1 // pred_check_branch
      %162 = sbr.rel (0) target = $region97
    $region96: #{tpu_custom_call.1} parent=1 // pred_region
      %163 = dma.done [#allocation9], 16
    $region97: #{tpu_custom_call.1} parent=1 // pred_fallthru
      _
    // Predicated region
    $region98: #{tpu_custom_call.1} parent=1 // pred_check
      _
    $region99: #{tpu_custom_call.1} parent=1 // pred_check_branch
      %165 = sbr.rel (0) target = $region101
    $region100: #{tpu_custom_call.1} parent=1 // pred_region
      %166 = dma.done [#allocation9], 256
    $region101: #{tpu_custom_call.1} parent=1 // pred_fallthru
      _
    // Predicated region
    $region102: #{tpu_custom_call.1} parent=1 // pred_check
      _
    $region103: #{tpu_custom_call.1} parent=1 // pred_check_branch
      %168 = sbr.rel (0) target = $region105
    $region104: #{tpu_custom_call.1} parent=1 // pred_region
      %169 = dma.done [#allocation12], 256
    $region105: #{tpu_custom_call.1} parent=1 // pred_fallthru
      _
    // Predicated region
    $region106: #{tpu_custom_call.1} parent=1 // pred_check
      _
    $region107: #{tpu_custom_call.1} parent=1 // pred_check_branch
      %171 = sbr.rel (0) target = $region109
    $region108: #{tpu_custom_call.1} parent=1 // pred_region
      %172 = dma.done [#allocation12], 16
    $region109: #{tpu_custom_call.1} parent=1 // pred_fallthru
      _
    // Predicated region
    $region110: #{tpu_custom_call.1} parent=1 // pred_check
      _
    $region111: #{tpu_custom_call.1} parent=1 // pred_check_branch
      %174 = sbr.rel (0) target = $region113
    $region112: #{tpu_custom_call.1} parent=1 // pred_region
      %175 = dma.done [#allocation15], 16
    $region113: #{tpu_custom_call.1} parent=1 // pred_fallthru
      _
    // Predicated region
    $region114: #{tpu_custom_call.1} parent=1 // pred_check
      _
    $region115: #{tpu_custom_call.1} parent=1 // pred_check_branch
      %177 = sbr.rel (0) target = $region117
    $region116: #{tpu_custom_call.1} parent=1 // pred_region
      %178 = dma.done [#allocation15], 16
    $region117: #{tpu_custom_call.1} parent=1 // pred_fallthru
      _
    %v180 = vld [vmem:[#allocation2] sm:$0xff]
    %v181 = vld [vmem:[%s0] sm:$0xff]
    %v182 = vld [vmem:[%s0 + $0x8] sm:$0xff]
    %v183 = vld [vmem:[%s1] sm:$0xff]
    %v184 = vld [vmem:[%s1 + $0x8] sm:$0xff]
    %v185 = vld [vmem:[%s3] sm:$0xf]
    %v186 = vld [vmem:[%s3 + $0x4] sm:$0xf]
    %v187 = vld [vmem:[%s3 + $0x8] sm:$0xf]
    %v188 = vld [vmem:[%s3 + $0xc] sm:$0xf]
    %v189 = vpack.c.bf16 %v182, %v181
    %v194 = vunpack.c.l.b16 %v185
    %v195 = vunpack.c.l.b16 %v186
    %v196 = vunpack.c.l.b16 %v187
    %v197 = vunpack.c.l.b16 %v188
    %v198 = vpack.c.b16 %v195, %v194
    %v199 = vpack.c.b16 %v197, %v196
    %vm202 = vcmask 261120
    %v204 = vsel %vm202, %v189, 0
    %206 = vmatprep.subr.bf16.mxu0 0
    %207 = vmatpush1.bf16.msra.mxu0 %v198
    %208 = vmatprep.subr.bf16.mxu0 0
    %209 = vmatpush1.bf16.msra.mxu0 %v199
    %210 = vmatprep.subr.bf16.mxu0 0
    %211 = vmatpush1.bf16.msra.mxu0 0
    %212 = vmatprep.subr.bf16.mxu0 0
    %213 = vmatpush1.bf16.msra.mxu0 0
    %214 = vmatprep.subr.bf16.mxu0 0
    %215 = vmatpush1.bf16.msra.mxu0 0
    %216 = vmatprep.subr.bf16.mxu0 0
    %217 = vmatpush1.bf16.msra.mxu0 0
    %218 = vmatprep.subr.bf16.mxu0 0
    %219 = vmatpush1.bf16.msra.mxu0 0
    %220 = vmatprep.subr.bf16.mxu0 0
    %221 = vmatpush1.bf16.msra.mxu0 0
    %222 = vmatprep.subr.bf16.mxu0 0
    %223 = vmatpush1.bf16.msra.mxu0 0
    %224 = vmatprep.subr.bf16.mxu0 0
    %225 = vmatpush1.bf16.msra.mxu0 0
    %226 = vmatprep.subr.bf16.mxu0 0
    %227 = vmatpush1.bf16.msra.mxu0 0
    %228 = vmatprep.subr.bf16.mxu0 0
    %229 = vmatpush1.bf16.msra.mxu0 0
    %230 = vmatprep.subr.bf16.mxu0 0
    %231 = vmatpush1.bf16.msra.mxu0 0
    %232 = vmatprep.subr.bf16.mxu0 0
    %233 = vmatpush1.bf16.msra.mxu0 0
    %234 = vmatprep.subr.bf16.mxu0 0
    %235 = vmatpush1.bf16.msra.mxu0 0
    %236 = vmatprep.subr.bf16.mxu0 0
    %237 = vmatpush1.bf16.msra.mxu0 0
    %238 = vmatprep.mubr.bf16.mxu0 0
    %239 = vmatmul.mubr.bf16.gmra.mrb[0].mxu0 %v204
    %v240 = vpop.f32.mrb[0].mxu0
    %v241 = vadd.f32 0.0, %v240
    %v242 = vpop.f32.mrb[0].mxu0
    %v243 = vpop.f32.mrb[0].mxu0
    %v244 = vadd.f32 0.0, %v243
    %v245 = vpop.f32.mrb[0].mxu0
    %246 = vdwg.mxu0
    %v247 = vpack.c.bf16 %v241, %v241
    %v248 = vpack.c.bf16 %v244, %v244
    %250 = vrot.lane.b32.xlu0 %v247, 96
    %v251 = vpop.permute.xlu0 %250
    %vm252 = vcmask 130048
    %v254 = vsel %vm252, %v247, 0
    %v257 = vsel %vm252, %v251, 0
    %259 = vmatprep.subr.bf16.mxu0 0
    %260 = vmatpush1.bf16.xpose.msra.mxu0 %v257
    %261 = vmatprep.subr.bf16.mxu0 0
    %262 = vmatpush1.bf16.xpose.msra.mxu0 0
    %263 = vmatprep.subr.bf16.mxu0 0
    %264 = vmatpush1.bf16.xpose.msra.mxu0 0
    %265 = vmatprep.subr.bf16.mxu0 0
    %266 = vmatpush1.bf16.xpose.msra.mxu0 0
    %267 = vmatprep.subr.bf16.mxu0 0
    %268 = vmatpush1.bf16.xpose.msra.mxu0 0
    %269 = vmatprep.subr.bf16.mxu0 0
    %270 = vmatpush1.bf16.xpose.msra.mxu0 0
    %271 = vmatprep.subr.bf16.mxu0 0
    %272 = vmatpush1.bf16.xpose.msra.mxu0 0
    %273 = vmatprep.subr.bf16.mxu0 0
    %274 = vmatpush1.bf16.xpose.msra.mxu0 0
    %275 = vmatprep.subr.bf16.mxu0 0
    %276 = vmatpush1.bf16.xpose.msra.mxu0 0
    %277 = vmatprep.subr.bf16.mxu0 0
    %278 = vmatpush1.bf16.xpose.msra.mxu0 0
    %279 = vmatprep.subr.bf16.mxu0 0
    %280 = vmatpush1.bf16.xpose.msra.mxu0 0
    %281 = vmatprep.subr.bf16.mxu0 0
    %282 = vmatpush1.bf16.xpose.msra.mxu0 0
    %283 = vmatprep.subr.bf16.mxu0 0
    %284 = vmatpush1.bf16.xpose.msra.mxu0 0
    %285 = vmatprep.subr.bf16.mxu0 0
    %286 = vmatpush1.bf16.xpose.msra.mxu0 0
    %287 = vmatprep.subr.bf16.mxu0 0
    %288 = vmatpush1.bf16.xpose.msra.mxu0 0
    %289 = vmatprep.subr.bf16.mxu0 0
    %290 = vmatpush1.bf16.xpose.msra.mxu0 0
    %291 = vmatprep.mubr.bf16.mxu0 0
    %292 = vmatmul.mubr.bf16.gmra.mrb[0].mxu0 %v254
    %v293 = vpop.f32.mrb[0].mxu0
    %v294 = vadd.f32 %v180, %v293
    %v295 = vpop.f32.mrb[0].mxu0
    %v296 = vpop.f32.mrb[0].mxu0
    %v297 = vpop.f32.mrb[0].mxu0
    %298 = vdwg.mxu0
    %300 = vrot.lane.b32.xlu0 %v248, 96
    %v301 = vpop.permute.xlu0 %300
    %v303 = vsel %vm252, %v248, 0
    %v306 = vsel %vm252, %v301, 0
    %308 = vmatprep.subr.bf16.mxu0 0
    %309 = vmatpush1.bf16.xpose.msra.mxu0 %v306
    %310 = vmatprep.subr.bf16.mxu0 0
    %311 = vmatpush1.bf16.xpose.msra.mxu0 0
    %312 = vmatprep.subr.bf16.mxu0 0
    %313 = vmatpush1.bf16.xpose.msra.mxu0 0
    %314 = vmatprep.subr.bf16.mxu0 0
    %315 = vmatpush1.bf16.xpose.msra.mxu0 0
    %316 = vmatprep.subr.bf16.mxu0 0
    %317 = vmatpush1.bf16.xpose.msra.mxu0 0
    %318 = vmatprep.subr.bf16.mxu0 0
    %319 = vmatpush1.bf16.xpose.msra.mxu0 0
    %320 = vmatprep.subr.bf16.mxu0 0
    %321 = vmatpush1.bf16.xpose.msra.mxu0 0
    %322 = vmatprep.subr.bf16.mxu0 0
    %323 = vmatpush1.bf16.xpose.msra.mxu0 0
    %324 = vmatprep.subr.bf16.mxu0 0
    %325 = vmatpush1.bf16.xpose.msra.mxu0 0
    %326 = vmatprep.subr.bf16.mxu0 0
    %327 = vmatpush1.bf16.xpose.msra.mxu0 0
    %328 = vmatprep.subr.bf16.mxu0 0
    %329 = vmatpush1.bf16.xpose.msra.mxu0 0
    %330 = vmatprep.subr.bf16.mxu0 0
    %331 = vmatpush1.bf16.xpose.msra.mxu0 0
    %332 = vmatprep.subr.bf16.mxu0 0
    %333 = vmatpush1.bf16.xpose.msra.mxu0 0
    %334 = vmatprep.subr.bf16.mxu0 0
    %335 = vmatpush1.bf16.xpose.msra.mxu0 0
    %336 = vmatprep.subr.bf16.mxu0 0
    %337 = vmatpush1.bf16.xpose.msra.mxu0 0
    %338 = vmatprep.subr.bf16.mxu0 0
    %339 = vmatpush1.bf16.xpose.msra.mxu0 0
    %340 = vmatprep.mubr.bf16.mxu0 0
    %341 = vmatmul.mubr.bf16.gmra.mrb[0].mxu0 %v303
    %v342 = vpop.f32.mrb[0].mxu0
    %v343 = vadd.f32 %v180, %v342
    %v344 = vpop.f32.mrb[0].mxu0
    %v345 = vpop.f32.mrb[0].mxu0
    %v346 = vpop.f32.mrb[0].mxu0
    %347 = vdwg.mxu0
    %vm348 = vcmask 64512
    %v349 = vsel %vm348, %v294, -inf
    %350 = vmax.xlane.f32.xlu0 %v349
    %v351 = vpop.xlane.xlu0 %350
    %v352 = vsel %vm348, %v343, -inf
    %353 = vmax.xlane.f32.xlu0 %v352
    %v354 = vpop.xlane.xlu0 %353
    %v355 = vsub.f32 %v294, %v351
    %v356 = vsub.f32 %v343, %v354
    %v357 = vmul.f32 %v355, 1.442695
    %v358 = vpow.pop %v357
    %v359 = vmul.f32 %v356, 1.442695
    %v360 = vpow.pop %v359
    %v361 = vsel %vm348, %v358, 0.0
    %362 = vadd.xlane.f32.xlu0 %v361
    %v363 = vpop.xlane.xlu0 %362
    %v364 = vsel %vm348, %v360, 0.0
    %365 = vadd.xlane.f32.xlu0 %v364
    %v366 = vpop.xlane.xlu0 %365
    %v367 = vrcp.pop %v363
    %v368 = vrcp.pop %v366
    %v369 = vmul.f32 %v358, %v367
    %v370 = vmul.f32 %v360, %v368
    %371 = vst.msk [vmem:[#allocation18] sm:$0xff] %vm348, %v369
    %372 = vst.msk [vmem:[#allocation18 + $0x8] sm:$0xff] %vm348, %v370
    %v373 = vpack.c.bf16 %v369, %v369
    %v374 = vpack.c.bf16 %v370, %v370
    %375 = vrot.lane.b32.xlu0 %v247, 64
    %v376 = vpop.permute.xlu0 %375
    %v378 = vsel %vm348, %v373, 0
    %vm380 = vcmask 1043456
    %v382 = vsel %vm380, %v376, 0
    %384 = vmatprep.subr.bf16.mxu0 0
    %385 = vmatpush1.bf16.msra.mxu0 %v382
    %386 = vmatprep.subr.bf16.mxu0 0
    %387 = vmatpush1.bf16.msra.mxu0 0
    %388 = vmatprep.subr.bf16.mxu0 0
    %389 = vmatpush1.bf16.msra.mxu0 0
    %390 = vmatprep.subr.bf16.mxu0 0
    %391 = vmatpush1.bf16.msra.mxu0 0
    %392 = vmatprep.subr.bf16.mxu0 0
    %393 = vmatpush1.bf16.msra.mxu0 0
    %394 = vmatprep.subr.bf16.mxu0 0
    %395 = vmatpush1.bf16.msra.mxu0 0
    %396 = vmatprep.subr.bf16.mxu0 0
    %397 = vmatpush1.bf16.msra.mxu0 0
    %398 = vmatprep.subr.bf16.mxu0 0
    %399 = vmatpush1.bf16.msra.mxu0 0
    %400 = vmatprep.subr.bf16.mxu0 0
    %401 = vmatpush1.bf16.msra.mxu0 0
    %402 = vmatprep.subr.bf16.mxu0 0
    %403 = vmatpush1.bf16.msra.mxu0 0
    %404 = vmatprep.subr.bf16.mxu0 0
    %405 = vmatpush1.bf16.msra.mxu0 0
    %406 = vmatprep.subr.bf16.mxu0 0
    %407 = vmatpush1.bf16.msra.mxu0 0
    %408 = vmatprep.subr.bf16.mxu0 0
    %409 = vmatpush1.bf16.msra.mxu0 0
    %410 = vmatprep.subr.bf16.mxu0 0
    %411 = vmatpush1.bf16.msra.mxu0 0
    %412 = vmatprep.subr.bf16.mxu0 0
    %413 = vmatpush1.bf16.msra.mxu0 0
    %414 = vmatprep.subr.bf16.mxu0 0
    %415 = vmatpush1.bf16.msra.mxu0 0
    %416 = vmatprep.mubr.bf16.mxu0 0
    %417 = vmatmul.mubr.bf16.gmra.mrb[0].mxu0 %v378
    %v418 = vpop.f32.mrb[0].mxu0
    %v419 = vadd.f32 0.0, %v418
    %v420 = vpop.f32.mrb[0].mxu0
    %v421 = vpop.f32.mrb[0].mxu0
    %v422 = vpop.f32.mrb[0].mxu0
    %423 = vdwg.mxu0
    %424 = vrot.lane.b32.xlu0 %v248, 64
    %v425 = vpop.permute.xlu0 %424
    %v427 = vsel %vm348, %v374, 0
    %v430 = vsel %vm380, %v425, 0
    %432 = vmatprep.subr.bf16.mxu0 0
    %433 = vmatpush1.bf16.msra.mxu0 %v430
    %434 = vmatprep.subr.bf16.mxu0 0
    %435 = vmatpush1.bf16.msra.mxu0 0
    %436 = vmatprep.subr.bf16.mxu0 0
    %437 = vmatpush1.bf16.msra.mxu0 0
    %438 = vmatprep.subr.bf16.mxu0 0
    %439 = vmatpush1.bf16.msra.mxu0 0
    %440 = vmatprep.subr.bf16.mxu0 0
    %441 = vmatpush1.bf16.msra.mxu0 0
    %442 = vmatprep.subr.bf16.mxu0 0
    %443 = vmatpush1.bf16.msra.mxu0 0
    %444 = vmatprep.subr.bf16.mxu0 0
    %445 = vmatpush1.bf16.msra.mxu0 0
    %446 = vmatprep.subr.bf16.mxu0 0
    %447 = vmatpush1.bf16.msra.mxu0 0
    %448 = vmatprep.subr.bf16.mxu0 0
    %449 = vmatpush1.bf16.msra.mxu0 0
    %450 = vmatprep.subr.bf16.mxu0 0
    %451 = vmatpush1.bf16.msra.mxu0 0
    %452 = vmatprep.subr.bf16.mxu0 0
    %453 = vmatpush1.bf16.msra.mxu0 0
    %454 = vmatprep.subr.bf16.mxu0 0
    %455 = vmatpush1.bf16.msra.mxu0 0
    %456 = vmatprep.subr.bf16.mxu0 0
    %457 = vmatpush1.bf16.msra.mxu0 0
    %458 = vmatprep.subr.bf16.mxu0 0
    %459 = vmatpush1.bf16.msra.mxu0 0
    %460 = vmatprep.subr.bf16.mxu0 0
    %461 = vmatpush1.bf16.msra.mxu0 0
    %462 = vmatprep.subr.bf16.mxu0 0
    %463 = vmatpush1.bf16.msra.mxu0 0
    %464 = vmatprep.mubr.bf16.mxu0 0
    %465 = vmatmul.mubr.bf16.gmra.mrb[0].mxu0 %v427
    %v466 = vpop.f32.mrb[0].mxu0
    %v467 = vadd.f32 0.0, %v466
    %v468 = vpop.f32.mrb[0].mxu0
    %v469 = vpop.f32.mrb[0].mxu0
    %v470 = vpop.f32.mrb[0].mxu0
    %471 = vdwg.mxu0
    %v472 = vld [vmem:[#allocation5] sm:$0xf]
    %v473 = vld [vmem:[#allocation5 + $0x4] sm:$0xf]
    %v474 = vpack.c.bf16 %v467, %v419
    %475 = vrot.lane.b32.xlu0 %v247, 112
    %v476 = vpop.permute.xlu0 %475
    %477 = vrot.lane.b32.xlu0 %v247, 80
    %v478 = vpop.permute.xlu0 %477
    %v480 = vsel %vm252, %v476, 0
    %v483 = vsel %vm252, %v478, 0
    %485 = vmatprep.subr.bf16.mxu0 0
    %486 = vmatpush1.bf16.xpose.msra.mxu0 %v483
    %487 = vmatprep.subr.bf16.mxu0 0
    %488 = vmatpush1.bf16.xpose.msra.mxu0 0
    %489 = vmatprep.subr.bf16.mxu0 0
    %490 = vmatpush1.bf16.xpose.msra.mxu0 0
    %491 = vmatprep.subr.bf16.mxu0 0
    %492 = vmatpush1.bf16.xpose.msra.mxu0 0
    %493 = vmatprep.subr.bf16.mxu0 0
    %494 = vmatpush1.bf16.xpose.msra.mxu0 0
    %495 = vmatprep.subr.bf16.mxu0 0
    %496 = vmatpush1.bf16.xpose.msra.mxu0 0
    %497 = vmatprep.subr.bf16.mxu0 0
    %498 = vmatpush1.bf16.xpose.msra.mxu0 0
    %499 = vmatprep.subr.bf16.mxu0 0
    %500 = vmatpush1.bf16.xpose.msra.mxu0 0
    %501 = vmatprep.subr.bf16.mxu0 0
    %502 = vmatpush1.bf16.xpose.msra.mxu0 0
    %503 = vmatprep.subr.bf16.mxu0 0
    %504 = vmatpush1.bf16.xpose.msra.mxu0 0
    %505 = vmatprep.subr.bf16.mxu0 0
    %506 = vmatpush1.bf16.xpose.msra.mxu0 0
    %507 = vmatprep.subr.bf16.mxu0 0
    %508 = vmatpush1.bf16.xpose.msra.mxu0 0
    %509 = vmatprep.subr.bf16.mxu0 0
    %510 = vmatpush1.bf16.xpose.msra.mxu0 0
    %511 = vmatprep.subr.bf16.mxu0 0
    %512 = vmatpush1.bf16.xpose.msra.mxu0 0
    %513 = vmatprep.subr.bf16.mxu0 0
    %514 = vmatpush1.bf16.xpose.msra.mxu0 0
    %515 = vmatprep.subr.bf16.mxu0 0
    %516 = vmatpush1.bf16.xpose.msra.mxu0 0
    %517 = vmatprep.mubr.bf16.mxu0 0
    %518 = vmatmul.mubr.bf16.gmra.mrb[0].mxu0 %v480
    %v519 = vpop.f32.mrb[0].mxu0
    %v520 = vadd.f32 %v180, %v519
    %v521 = vpop.f32.mrb[0].mxu0
    %v522 = vpop.f32.mrb[0].mxu0
    %v523 = vpop.f32.mrb[0].mxu0
    %524 = vdwg.mxu0
    %525 = vrot.lane.b32.xlu0 %v248, 112
    %v526 = vpop.permute.xlu0 %525
    %527 = vrot.lane.b32.xlu0 %v248, 80
    %v528 = vpop.permute.xlu0 %527
    %v530 = vsel %vm252, %v526, 0
    %v533 = vsel %vm252, %v528, 0
    %535 = vmatprep.subr.bf16.mxu0 0
    %536 = vmatpush1.bf16.xpose.msra.mxu0 %v533
    %537 = vmatprep.subr.bf16.mxu0 0
    %538 = vmatpush1.bf16.xpose.msra.mxu0 0
    %539 = vmatprep.subr.bf16.mxu0 0
    %540 = vmatpush1.bf16.xpose.msra.mxu0 0
    %541 = vmatprep.subr.bf16.mxu0 0
    %542 = vmatpush1.bf16.xpose.msra.mxu0 0
    %543 = vmatprep.subr.bf16.mxu0 0
    %544 = vmatpush1.bf16.xpose.msra.mxu0 0
    %545 = vmatprep.subr.bf16.mxu0 0
    %546 = vmatpush1.bf16.xpose.msra.mxu0 0
    %547 = vmatprep.subr.bf16.mxu0 0
    %548 = vmatpush1.bf16.xpose.msra.mxu0 0
    %549 = vmatprep.subr.bf16.mxu0 0
    %550 = vmatpush1.bf16.xpose.msra.mxu0 0
    %551 = vmatprep.subr.bf16.mxu0 0
    %552 = vmatpush1.bf16.xpose.msra.mxu0 0
    %553 = vmatprep.subr.bf16.mxu0 0
    %554 = vmatpush1.bf16.xpose.msra.mxu0 0
    %555 = vmatprep.subr.bf16.mxu0 0
    %556 = vmatpush1.bf16.xpose.msra.mxu0 0
    %557 = vmatprep.subr.bf16.mxu0 0
    %558 = vmatpush1.bf16.xpose.msra.mxu0 0
    %559 = vmatprep.subr.bf16.mxu0 0
    %560 = vmatpush1.bf16.xpose.msra.mxu0 0
    %561 = vmatprep.subr.bf16.mxu0 0
    %562 = vmatpush1.bf16.xpose.msra.mxu0 0
    %563 = vmatprep.subr.bf16.mxu0 0
    %564 = vmatpush1.bf16.xpose.msra.mxu0 0
    %565 = vmatprep.subr.bf16.mxu0 0
    %566 = vmatpush1.bf16.xpose.msra.mxu0 0
    %567 = vmatprep.mubr.bf16.mxu0 0
    %568 = vmatmul.mubr.bf16.gmra.mrb[0].mxu0 %v530
    %v569 = vpop.f32.mrb[0].mxu0
    %v570 = vadd.f32 %v180, %v569
    %v571 = vpop.f32.mrb[0].mxu0
    %v572 = vpop.f32.mrb[0].mxu0
    %v573 = vpop.f32.mrb[0].mxu0
    %574 = vdwg.mxu0
    %v575 = vsel %vm348, %v520, -inf
    %576 = vmax.xlane.f32.xlu0 %v575
    %v577 = vpop.xlane.xlu0 %576
    %v578 = vsel %vm348, %v570, -inf
    %579 = vmax.xlane.f32.xlu0 %v578
    %v580 = vpop.xlane.xlu0 %579
    %v581 = vsub.f32 %v520, %v577
    %v582 = vsub.f32 %v570, %v580
    %v583 = vmul.f32 %v581, 1.442695
    %v584 = vpow.pop %v583
    %v585 = vmul.f32 %v582, 1.442695
    %v586 = vpow.pop %v585
    %v587 = vsel %vm348, %v584, 0.0
    %588 = vadd.xlane.f32.xlu0 %v587
    %v589 = vpop.xlane.xlu0 %588
    %v590 = vsel %vm348, %v586, 0.0
    %591 = vadd.xlane.f32.xlu0 %v590
    %v592 = vpop.xlane.xlu0 %591
    %v593 = vrcp.pop %v589
    %v594 = vrcp.pop %v592
    %v595 = vmul.f32 %v584, %v593
    %v596 = vmul.f32 %v586, %v594
    %599 = vrot.lane.b32.xlu0 %v595, 8
    %v600 = vpop.permute.xlu0 %599
    %601 = vrot.lane.b32.xlu0 %v596, 8
    %v602 = vpop.permute.xlu0 %601
    %vm605 = vcmask 130112
    %606 = vst.msk [vmem:[#allocation18] sm:$0xff] %vm605, %v600
    %607 = vst.msk [vmem:[#allocation18 + $0x8] sm:$0xff] %vm605, %v602
    %v608 = vpack.c.bf16 %v595, %v595
    %v609 = vpack.c.bf16 %v596, %v596
    %610 = vrot.lane.b32.xlu0 %v247, 48
    %v611 = vpop.permute.xlu0 %610
    %v613 = vsel %vm348, %v608, 0
    %v616 = vsel %vm380, %v611, 0
    %618 = vmatprep.subr.bf16.mxu0 0
    %619 = vmatpush1.bf16.msra.mxu0 %v616
    %620 = vmatprep.subr.bf16.mxu0 0
    %621 = vmatpush1.bf16.msra.mxu0 0
    %622 = vmatprep.subr.bf16.mxu0 0
    %623 = vmatpush1.bf16.msra.mxu0 0
    %624 = vmatprep.subr.bf16.mxu0 0
    %625 = vmatpush1.bf16.msra.mxu0 0
    %626 = vmatprep.subr.bf16.mxu0 0
    %627 = vmatpush1.bf16.msra.mxu0 0
    %628 = vmatprep.subr.bf16.mxu0 0
    %629 = vmatpush1.bf16.msra.mxu0 0
    %630 = vmatprep.subr.bf16.mxu0 0
    %631 = vmatpush1.bf16.msra.mxu0 0
    %632 = vmatprep.subr.bf16.mxu0 0
    %633 = vmatpush1.bf16.msra.mxu0 0
    %634 = vmatprep.subr.bf16.mxu0 0
    %635 = vmatpush1.bf16.msra.mxu0 0
    %636 = vmatprep.subr.bf16.mxu0 0
    %637 = vmatpush1.bf16.msra.mxu0 0
    %638 = vmatprep.subr.bf16.mxu0 0
    %639 = vmatpush1.bf16.msra.mxu0 0
    %640 = vmatprep.subr.bf16.mxu0 0
    %641 = vmatpush1.bf16.msra.mxu0 0
    %642 = vmatprep.subr.bf16.mxu0 0
    %643 = vmatpush1.bf16.msra.mxu0 0
    %644 = vmatprep.subr.bf16.mxu0 0
    %645 = vmatpush1.bf16.msra.mxu0 0
    %646 = vmatprep.subr.bf16.mxu0 0
    %647 = vmatpush1.bf16.msra.mxu0 0
    %648 = vmatprep.subr.bf16.mxu0 0
    %649 = vmatpush1.bf16.msra.mxu0 0
    %650 = vmatprep.mubr.bf16.mxu0 0
    %651 = vmatmul.mubr.bf16.gmra.mrb[0].mxu0 %v613
    %v652 = vpop.f32.mrb[0].mxu0
    %v653 = vadd.f32 0.0, %v652
    %v654 = vpop.f32.mrb[0].mxu0
    %v655 = vpop.f32.mrb[0].mxu0
    %v656 = vpop.f32.mrb[0].mxu0
    %657 = vdwg.mxu0
    %658 = vrot.lane.b32.xlu0 %v248, 48
    %v659 = vpop.permute.xlu0 %658
    %v661 = vsel %vm348, %v609, 0
    %v664 = vsel %vm380, %v659, 0
    %666 = vmatprep.subr.bf16.mxu0 0
    %667 = vmatpush1.bf16.msra.mxu0 %v664
    %668 = vmatprep.subr.bf16.mxu0 0
    %669 = vmatpush1.bf16.msra.mxu0 0
    %670 = vmatprep.subr.bf16.mxu0 0
    %671 = vmatpush1.bf16.msra.mxu0 0
    %672 = vmatprep.subr.bf16.mxu0 0
    %673 = vmatpush1.bf16.msra.mxu0 0
    %674 = vmatprep.subr.bf16.mxu0 0
    %675 = vmatpush1.bf16.msra.mxu0 0
    %676 = vmatprep.subr.bf16.mxu0 0
    %677 = vmatpush1.bf16.msra.mxu0 0
    %678 = vmatprep.subr.bf16.mxu0 0
    %679 = vmatpush1.bf16.msra.mxu0 0
    %680 = vmatprep.subr.bf16.mxu0 0
    %681 = vmatpush1.bf16.msra.mxu0 0
    %682 = vmatprep.subr.bf16.mxu0 0
    %683 = vmatpush1.bf16.msra.mxu0 0
    %684 = vmatprep.subr.bf16.mxu0 0
    %685 = vmatpush1.bf16.msra.mxu0 0
    %686 = vmatprep.subr.bf16.mxu0 0
    %687 = vmatpush1.bf16.msra.mxu0 0
    %688 = vmatprep.subr.bf16.mxu0 0
    %689 = vmatpush1.bf16.msra.mxu0 0
    %690 = vmatprep.subr.bf16.mxu0 0
    %691 = vmatpush1.bf16.msra.mxu0 0
    %692 = vmatprep.subr.bf16.mxu0 0
    %693 = vmatpush1.bf16.msra.mxu0 0
    %694 = vmatprep.subr.bf16.mxu0 0
    %695 = vmatpush1.bf16.msra.mxu0 0
    %696 = vmatprep.subr.bf16.mxu0 0
    %697 = vmatpush1.bf16.msra.mxu0 0
    %698 = vmatprep.mubr.bf16.mxu0 0
    %699 = vmatmul.mubr.bf16.gmra.mrb[0].mxu0 %v661
    %v700 = vpop.f32.mrb[0].mxu0
    %v701 = vadd.f32 0.0, %v700
    %v702 = vpop.f32.mrb[0].mxu0
    %v703 = vpop.f32.mrb[0].mxu0
    %v704 = vpop.f32.mrb[0].mxu0
    %705 = vdwg.mxu0
    %v706 = vld [vmem:[#allocation5 + $0x8] sm:$0xf]
    %v707 = vld [vmem:[#allocation5 + $0xc] sm:$0xf]
    %v708 = vpack.c.bf16 %v701, %v653
    %v711 = vunpack.c.l.b16 %v706
    %v712 = vunpack.c.l.b16 %v707
    %v713 = vpack.c.b16 %v712, %v711
    %v716 = vsel %vm252, %v708, 0
    %718 = vmatprep.subr.bf16.mxu0 0
    %719 = vmatpush1.bf16.msra.mxu0 %v713
    %720 = vmatprep.subr.bf16.mxu0 0
    %721 = vmatpush1.bf16.msra.mxu0 0
    %722 = vmatprep.subr.bf16.mxu0 0
    %723 = vmatpush1.bf16.msra.mxu0 0
    %724 = vmatprep.subr.bf16.mxu0 0
    %725 = vmatpush1.bf16.msra.mxu0 0
    %726 = vmatprep.subr.bf16.mxu0 0
    %727 = vmatpush1.bf16.msra.mxu0 0
    %728 = vmatprep.subr.bf16.mxu0 0
    %729 = vmatpush1.bf16.msra.mxu0 0
    %730 = vmatprep.subr.bf16.mxu0 0
    %731 = vmatpush1.bf16.msra.mxu0 0
    %732 = vmatprep.subr.bf16.mxu0 0
    %733 = vmatpush1.bf16.msra.mxu0 0
    %734 = vmatprep.subr.bf16.mxu0 0
    %735 = vmatpush1.bf16.msra.mxu0 0
    %736 = vmatprep.subr.bf16.mxu0 0
    %737 = vmatpush1.bf16.msra.mxu0 0
    %738 = vmatprep.subr.bf16.mxu0 0
    %739 = vmatpush1.bf16.msra.mxu0 0
    %740 = vmatprep.subr.bf16.mxu0 0
    %741 = vmatpush1.bf16.msra.mxu0 0
    %742 = vmatprep.subr.bf16.mxu0 0
    %743 = vmatpush1.bf16.msra.mxu0 0
    %744 = vmatprep.subr.bf16.mxu0 0
    %745 = vmatpush1.bf16.msra.mxu0 0
    %746 = vmatprep.subr.bf16.mxu0 0
    %747 = vmatpush1.bf16.msra.mxu0 0
    %748 = vmatprep.subr.bf16.mxu0 0
    %749 = vmatpush1.bf16.msra.mxu0 0
    %750 = vmatprep.mubr.bf16.mxu0 0
    %751 = vmatmul.mubr.bf16.gmra.mrb[0].mxu0 %v716
    %v752 = vpop.f32.mrb[0].mxu0
    %v753 = vadd.f32 0.0, %v752
    %v754 = vpop.f32.mrb[0].mxu0
    %v755 = vpop.f32.mrb[0].mxu0
    %v756 = vadd.f32 0.0, %v755
    %v757 = vpop.f32.mrb[0].mxu0
    %758 = vdwg.mxu0
    %v761 = vunpack.c.l.b16 %v472
    %v762 = vunpack.c.l.b16 %v473
    %v763 = vpack.c.b16 %v762, %v761
    %v766 = vsel %vm252, %v474, 0
    %768 = vmatprep.subr.bf16.mxu0 0
    %769 = vmatpush1.bf16.msra.mxu0 %v763
    %770 = vmatprep.subr.bf16.mxu0 0
    %771 = vmatpush1.bf16.msra.mxu0 0
    %772 = vmatprep.subr.bf16.mxu0 0
    %773 = vmatpush1.bf16.msra.mxu0 0
    %774 = vmatprep.subr.bf16.mxu0 0
    %775 = vmatpush1.bf16.msra.mxu0 0
    %776 = vmatprep.subr.bf16.mxu0 0
    %777 = vmatpush1.bf16.msra.mxu0 0
    %778 = vmatprep.subr.bf16.mxu0 0
    %779 = vmatpush1.bf16.msra.mxu0 0
    %780 = vmatprep.subr.bf16.mxu0 0
    %781 = vmatpush1.bf16.msra.mxu0 0
    %782 = vmatprep.subr.bf16.mxu0 0
    %783 = vmatpush1.bf16.msra.mxu0 0
    %784 = vmatprep.subr.bf16.mxu0 0
    %785 = vmatpush1.bf16.msra.mxu0 0
    %786 = vmatprep.subr.bf16.mxu0 0
    %787 = vmatpush1.bf16.msra.mxu0 0
    %788 = vmatprep.subr.bf16.mxu0 0
    %789 = vmatpush1.bf16.msra.mxu0 0
    %790 = vmatprep.subr.bf16.mxu0 0
    %791 = vmatpush1.bf16.msra.mxu0 0
    %792 = vmatprep.subr.bf16.mxu0 0
    %793 = vmatpush1.bf16.msra.mxu0 0
    %794 = vmatprep.subr.bf16.mxu0 0
    %795 = vmatpush1.bf16.msra.mxu0 0
    %796 = vmatprep.subr.bf16.mxu0 0
    %797 = vmatpush1.bf16.msra.mxu0 0
    %798 = vmatprep.subr.bf16.mxu0 0
    %799 = vmatpush1.bf16.msra.mxu0 0
    %800 = vmatprep.mubr.bf16.mxu0 0
    %801 = vmatmul.mubr.bf16.gmra.mrb[0].mxu0 %v766
    %v802 = vpop.f32.mrb[0].mxu0
    %v803 = vadd.f32 %v753, %v802
    %v804 = vpop.f32.mrb[0].mxu0
    %v805 = vpop.f32.mrb[0].mxu0
    %v806 = vadd.f32 %v756, %v805
    %v807 = vpop.f32.mrb[0].mxu0
    %808 = vdwg.mxu0
    %v809 = vld [vmem:[%s5] sm:$0x1]
    %v811 = vlaneseq
    %v812 = vshrl.u32 %v811, 7
    %v813 = vsub.s32 0, %v812
    %v814 = vrot.slane %v809, %v813
    %v816 = vadd.f32 %v803, %v814
    %v817 = vadd.f32 %v806, %v814
    %v818 = vmax.f32 %v816, 0.0
    %v819 = vmax.f32 %v817, 0.0
    %v820 = vld [vmem:[#allocation7] sm:$0x1]
    %v821 = vld [vmem:[#allocation8] sm:$0x1]
    %v822 = vadd.f32 %v181, %v818
    %v823 = vadd.f32 %v182, %v819
    %v824 = vsel %vm202, %v822, 0.0
    %825 = vadd.xlane.f32.xlu0 %v824
    %v826 = vpop.xlane.xlu0 %825
    %v827 = vsel %vm202, %v823, 0.0
    %828 = vadd.xlane.f32.xlu0 %v827
    %v829 = vpop.xlane.xlu0 %828
    %v830 = vrcp.pop 32.0
    %v831 = vmul.f32 %v826, %v830
    %v832 = vmul.f32 %v829, %v830
    %v833 = vsub.f32 %v822, %v831
    %v834 = vsub.f32 %v823, %v832
    %v835 = vmul.f32 %v833, %v833
    %v836 = vmul.f32 %v834, %v834
    %v837 = vsel %vm202, %v835, 0.0
    %838 = vadd.xlane.f32.xlu0 %v837
    %v839 = vpop.xlane.xlu0 %838
    %v840 = vsel %vm202, %v836, 0.0
    %841 = vadd.xlane.f32.xlu0 %v840
    %v842 = vpop.xlane.xlu0 %841
    %v843 = vmul.f32 %v839, %v830
    %v844 = vmul.f32 %v842, %v830
    %v845 = vadd.f32 %v843, 1e-05
    %v846 = vadd.f32 %v844, 1e-05
    %v847 = vrsqrt.pop %v845
    %v848 = vrsqrt.pop %v846
    %v849 = vmul.f32 %v833, %v847
    %v850 = vmul.f32 %v834, %v848
    %v852 = vlaneseq
    %v853 = vshrl.u32 %v852, 7
    %v854 = vsub.s32 0, %v853
    %v855 = vrot.slane %v820, %v854
    %v857 = vmul.f32 %v849, %v855
    %v858 = vmul.f32 %v850, %v855
    %v860 = vlaneseq
    %v861 = vshrl.u32 %v860, 7
    %v862 = vsub.s32 0, %v861
    %v863 = vrot.slane %v821, %v862
    %v865 = vadd.f32 %v857, %v863
    %v866 = vadd.f32 %v858, %v863
    %v867 = vld [vmem:[#allocation10] sm:$0xf]
    %v868 = vld [vmem:[#allocation10 + $0x4] sm:$0xf]
    %v869 = vld [vmem:[#allocation10 + $0x8] sm:$0xf]
    %v870 = vld [vmem:[#allocation10 + $0xc] sm:$0xf]
    %v871 = vpack.c.bf16 %v866, %v865
    %v876 = vunpack.c.l.b16 %v867
    %v877 = vunpack.c.l.b16 %v868
    %v878 = vunpack.c.l.b16 %v869
    %v879 = vunpack.c.l.b16 %v870
    %v880 = vpack.c.b16 %v877, %v876
    %v881 = vpack.c.b16 %v879, %v878
    %v885 = vsel %vm202, %v871, 0
    %887 = vmatprep.subr.bf16.mxu0 0
    %888 = vmatpush1.bf16.msra.mxu0 %v880
    %889 = vmatprep.subr.bf16.mxu0 0
    %890 = vmatpush1.bf16.msra.mxu0 %v881
    %891 = vmatprep.subr.bf16.mxu0 0
    %892 = vmatpush1.bf16.msra.mxu0 0
    %893 = vmatprep.subr.bf16.mxu0 0
    %894 = vmatpush1.bf16.msra.mxu0 0
    %895 = vmatprep.subr.bf16.mxu0 0
    %896 = vmatpush1.bf16.msra.mxu0 0
    %897 = vmatprep.subr.bf16.mxu0 0
    %898 = vmatpush1.bf16.msra.mxu0 0
    %899 = vmatprep.subr.bf16.mxu0 0
    %900 = vmatpush1.bf16.msra.mxu0 0
    %901 = vmatprep.subr.bf16.mxu0 0
    %902 = vmatpush1.bf16.msra.mxu0 0
    %903 = vmatprep.subr.bf16.mxu0 0
    %904 = vmatpush1.bf16.msra.mxu0 0
    %905 = vmatprep.subr.bf16.mxu0 0
    %906 = vmatpush1.bf16.msra.mxu0 0
    %907 = vmatprep.subr.bf16.mxu0 0
    %908 = vmatpush1.bf16.msra.mxu0 0
    %909 = vmatprep.subr.bf16.mxu0 0
    %910 = vmatpush1.bf16.msra.mxu0 0
    %911 = vmatprep.subr.bf16.mxu0 0
    %912 = vmatpush1.bf16.msra.mxu0 0
    %913 = vmatprep.subr.bf16.mxu0 0
    %914 = vmatpush1.bf16.msra.mxu0 0
    %915 = vmatprep.subr.bf16.mxu0 0
    %916 = vmatpush1.bf16.msra.mxu0 0
    %917 = vmatprep.subr.bf16.mxu0 0
    %918 = vmatpush1.bf16.msra.mxu0 0
    %919 = vmatprep.mubr.bf16.mxu0 0
    %920 = vmatmul.mubr.bf16.gmra.mrb[0].mxu0 %v885
    %v921 = vpop.f32.mrb[0].mxu0
    %v922 = vadd.f32 0.0, %v921
    %v923 = vpop.f32.mrb[0].mxu0
    %v924 = vpop.f32.mrb[0].mxu0
    %v925 = vadd.f32 0.0, %v924
    %v926 = vpop.f32.mrb[0].mxu0
    %927 = vdwg.mxu0
    %v928 = vld [vmem:[%s9] sm:$0xf]
    %v929 = vld [vmem:[%s9 + $0x4] sm:$0xf]
    %v930 = vld [vmem:[%s9 + $0x8] sm:$0xf]
    %v931 = vld [vmem:[%s9 + $0xc] sm:$0xf]
    %v932 = vpack.c.bf16 %v184, %v183
    %v937 = vunpack.c.l.b16 %v928
    %v938 = vunpack.c.l.b16 %v929
    %v939 = vunpack.c.l.b16 %v930
    %v940 = vunpack.c.l.b16 %v931
    %v941 = vpack.c.b16 %v938, %v937
    %v942 = vpack.c.b16 %v940, %v939
    %v946 = vsel %vm202, %v932, 0
    %948 = vmatprep.subr.bf16.mxu0 0
    %949 = vmatpush1.bf16.msra.mxu0 %v941
    %950 = vmatprep.subr.bf16.mxu0 0
    %951 = vmatpush1.bf16.msra.mxu0 %v942
    %952 = vmatprep.subr.bf16.mxu0 0
    %953 = vmatpush1.bf16.msra.mxu0 0
    %954 = vmatprep.subr.bf16.mxu0 0
    %955 = vmatpush1.bf16.msra.mxu0 0
    %956 = vmatprep.subr.bf16.mxu0 0
    %957 = vmatpush1.bf16.msra.mxu0 0
    %958 = vmatprep.subr.bf16.mxu0 0
    %959 = vmatpush1.bf16.msra.mxu0 0
    %960 = vmatprep.subr.bf16.mxu0 0
    %961 = vmatpush1.bf16.msra.mxu0 0
    %962 = vmatprep.subr.bf16.mxu0 0
    %963 = vmatpush1.bf16.msra.mxu0 0
    %964 = vmatprep.subr.bf16.mxu0 0
    %965 = vmatpush1.bf16.msra.mxu0 0
    %966 = vmatprep.subr.bf16.mxu0 0
    %967 = vmatpush1.bf16.msra.mxu0 0
    %968 = vmatprep.subr.bf16.mxu0 0
    %969 = vmatpush1.bf16.msra.mxu0 0
    %970 = vmatprep.subr.bf16.mxu0 0
    %971 = vmatpush1.bf16.msra.mxu0 0
    %972 = vmatprep.subr.bf16.mxu0 0
    %973 = vmatpush1.bf16.msra.mxu0 0
    %974 = vmatprep.subr.bf16.mxu0 0
    %975 = vmatpush1.bf16.msra.mxu0 0
    %976 = vmatprep.subr.bf16.mxu0 0
    %977 = vmatpush1.bf16.msra.mxu0 0
    %978 = vmatprep.subr.bf16.mxu0 0
    %979 = vmatpush1.bf16.msra.mxu0 0
    %980 = vmatprep.mubr.bf16.mxu0 0
    %981 = vmatmul.mubr.bf16.gmra.mrb[0].mxu0 %v946
    %v982 = vpop.f32.mrb[0].mxu0
    %v983 = vadd.f32 0.0, %v982
    %v984 = vpop.f32.mrb[0].mxu0
    %v985 = vpop.f32.mrb[0].mxu0
    %v986 = vadd.f32 0.0, %v985
    %v987 = vpop.f32.mrb[0].mxu0
    %988 = vdwg.mxu0
    %v989 = vpack.c.bf16 %v922, %v922
    %v990 = vpack.c.bf16 %v925, %v925
    %v991 = vpack.c.bf16 %v983, %v983
    %v992 = vpack.c.bf16 %v986, %v986
    %v994 = vsel %vm252, %v989, 0
    %v997 = vsel %vm252, %v991, 0
    %999 = vmatprep.subr.bf16.mxu0 0
    %1000 = vmatpush1.bf16.xpose.msra.mxu0 %v997
    %1001 = vmatprep.subr.bf16.mxu0 0
    %1002 = vmatpush1.bf16.xpose.msra.mxu0 0
    %1003 = vmatprep.subr.bf16.mxu0 0
    %1004 = vmatpush1.bf16.xpose.msra.mxu0 0
    %1005 = vmatprep.subr.bf16.mxu0 0
    %1006 = vmatpush1.bf16.xpose.msra.mxu0 0
    %1007 = vmatprep.subr.bf16.mxu0 0
    %1008 = vmatpush1.bf16.xpose.msra.mxu0 0
    %1009 = vmatprep.subr.bf16.mxu0 0
    %1010 = vmatpush1.bf16.xpose.msra.mxu0 0
    %1011 = vmatprep.subr.bf16.mxu0 0
    %1012 = vmatpush1.bf16.xpose.msra.mxu0 0
    %1013 = vmatprep.subr.bf16.mxu0 0
    %1014 = vmatpush1.bf16.xpose.msra.mxu0 0
    %1015 = vmatprep.subr.bf16.mxu0 0
    %1016 = vmatpush1.bf16.xpose.msra.mxu0 0
    %1017 = vmatprep.subr.bf16.mxu0 0
    %1018 = vmatpush1.bf16.xpose.msra.mxu0 0
    %1019 = vmatprep.subr.bf16.mxu0 0
    %1020 = vmatpush1.bf16.xpose.msra.mxu0 0
    %1021 = vmatprep.subr.bf16.mxu0 0
    %1022 = vmatpush1.bf16.xpose.msra.mxu0 0
    %1023 = vmatprep.subr.bf16.mxu0 0
    %1024 = vmatpush1.bf16.xpose.msra.mxu0 0
    %1025 = vmatprep.subr.bf16.mxu0 0
    %1026 = vmatpush1.bf16.xpose.msra.mxu0 0
    %1027 = vmatprep.subr.bf16.mxu0 0
    %1028 = vmatpush1.bf16.xpose.msra.mxu0 0
    %1029 = vmatprep.subr.bf16.mxu0 0
    %1030 = vmatpush1.bf16.xpose.msra.mxu0 0
    %1031 = vmatprep.mubr.bf16.mxu0 0
    %1032 = vmatmul.mubr.bf16.gmra.mrb[0].mxu0 %v994
    %v1033 = vpop.f32.mrb[0].mxu0
    %v1034 = vadd.f32 0.0, %v1033
    %v1035 = vpop.f32.mrb[0].mxu0
    %v1036 = vpop.f32.mrb[0].mxu0
    %v1037 = vpop.f32.mrb[0].mxu0
    %1038 = vdwg.mxu0
    %v1040 = vsel %vm252, %v990, 0
    %v1043 = vsel %vm252, %v992, 0
    %1045 = vmatprep.subr.bf16.mxu0 0
    %1046 = vmatpush1.bf16.xpose.msra.mxu0 %v1043
    %1047 = vmatprep.subr.bf16.mxu0 0
    %1048 = vmatpush1.bf16.xpose.msra.mxu0 0
    %1049 = vmatprep.subr.bf16.mxu0 0
    %1050 = vmatpush1.bf16.xpose.msra.mxu0 0
    %1051 = vmatprep.subr.bf16.mxu0 0
    %1052 = vmatpush1.bf16.xpose.msra.mxu0 0
    %1053 = vmatprep.subr.bf16.mxu0 0
    %1054 = vmatpush1.bf16.xpose.msra.mxu0 0
    %1055 = vmatprep.subr.bf16.mxu0 0
    %1056 = vmatpush1.bf16.xpose.msra.mxu0 0
    %1057 = vmatprep.subr.bf16.mxu0 0
    %1058 = vmatpush1.bf16.xpose.msra.mxu0 0
    %1059 = vmatprep.subr.bf16.mxu0 0
    %1060 = vmatpush1.bf16.xpose.msra.mxu0 0
    %1061 = vmatprep.subr.bf16.mxu0 0
    %1062 = vmatpush1.bf16.xpose.msra.mxu0 0
    %1063 = vmatprep.subr.bf16.mxu0 0
    %1064 = vmatpush1.bf16.xpose.msra.mxu0 0
    %1065 = vmatprep.subr.bf16.mxu0 0
    %1066 = vmatpush1.bf16.xpose.msra.mxu0 0
    %1067 = vmatprep.subr.bf16.mxu0 0
    %1068 = vmatpush1.bf16.xpose.msra.mxu0 0
    %1069 = vmatprep.subr.bf16.mxu0 0
    %1070 = vmatpush1.bf16.xpose.msra.mxu0 0
    %1071 = vmatprep.subr.bf16.mxu0 0
    %1072 = vmatpush1.bf16.xpose.msra.mxu0 0
    %1073 = vmatprep.subr.bf16.mxu0 0
    %1074 = vmatpush1.bf16.xpose.msra.mxu0 0
    %1075 = vmatprep.subr.bf16.mxu0 0
    %1076 = vmatpush1.bf16.xpose.msra.mxu0 0
    %1077 = vmatprep.mubr.bf16.mxu0 0
    %1078 = vmatmul.mubr.bf16.gmra.mrb[0].mxu0 %v1040
    %v1079 = vpop.f32.mrb[0].mxu0
    %v1080 = vadd.f32 0.0, %v1079
    %v1081 = vpop.f32.mrb[0].mxu0
    %v1082 = vpop.f32.mrb[0].mxu0
    %v1083 = vpop.f32.mrb[0].mxu0
    %1084 = vdwg.mxu0
    %v1085 = vsel %vm348, %v1034, -inf
    %1086 = vmax.xlane.f32.xlu0 %v1085
    %v1087 = vpop.xlane.xlu0 %1086
    %v1088 = vsel %vm348, %v1080, -inf
    %1089 = vmax.xlane.f32.xlu0 %v1088
    %v1090 = vpop.xlane.xlu0 %1089
    %v1091 = vsub.f32 %v1034, %v1087
    %v1092 = vsub.f32 %v1080, %v1090
    %v1093 = vmul.f32 %v1091, 1.442695
    %v1094 = vpow.pop %v1093
    %v1095 = vmul.f32 %v1092, 1.442695
    %v1096 = vpow.pop %v1095
    %v1097 = vsel %vm348, %v1094, 0.0
    %1098 = vadd.xlane.f32.xlu0 %v1097
    %v1099 = vpop.xlane.xlu0 %1098
    %v1100 = vsel %vm348, %v1096, 0.0
    %1101 = vadd.xlane.f32.xlu0 %v1100
    %v1102 = vpop.xlane.xlu0 %1101
    %v1103 = vrcp.pop %v1099
    %v1104 = vrcp.pop %v1102
    %v1105 = vmul.f32 %v1094, %v1103
    %v1106 = vmul.f32 %v1096, %v1104
    %v1107 = vpack.c.bf16 %v1105, %v1105
    %v1108 = vpack.c.bf16 %v1106, %v1106
    %1110 = vrot.lane.b32.xlu0 %v991, 96
    %v1111 = vpop.permute.xlu0 %1110
    %v1113 = vsel %vm348, %v1107, 0
    %v1116 = vsel %vm380, %v1111, 0
    %1118 = vmatprep.subr.bf16.mxu0 0
    %1119 = vmatpush1.bf16.msra.mxu0 %v1116
    %1120 = vmatprep.subr.bf16.mxu0 0
    %1121 = vmatpush1.bf16.msra.mxu0 0
    %1122 = vmatprep.subr.bf16.mxu0 0
    %1123 = vmatpush1.bf16.msra.mxu0 0
    %1124 = vmatprep.subr.bf16.mxu0 0
    %1125 = vmatpush1.bf16.msra.mxu0 0
    %1126 = vmatprep.subr.bf16.mxu0 0
    %1127 = vmatpush1.bf16.msra.mxu0 0
    %1128 = vmatprep.subr.bf16.mxu0 0
    %1129 = vmatpush1.bf16.msra.mxu0 0
    %1130 = vmatprep.subr.bf16.mxu0 0
    %1131 = vmatpush1.bf16.msra.mxu0 0
    %1132 = vmatprep.subr.bf16.mxu0 0
    %1133 = vmatpush1.bf16.msra.mxu0 0
    %1134 = vmatprep.subr.bf16.mxu0 0
    %1135 = vmatpush1.bf16.msra.mxu0 0
    %1136 = vmatprep.subr.bf16.mxu0 0
    %1137 = vmatpush1.bf16.msra.mxu0 0
    %1138 = vmatprep.subr.bf16.mxu0 0
    %1139 = vmatpush1.bf16.msra.mxu0 0
    %1140 = vmatprep.subr.bf16.mxu0 0
    %1141 = vmatpush1.bf16.msra.mxu0 0
    %1142 = vmatprep.subr.bf16.mxu0 0
    %1143 = vmatpush1.bf16.msra.mxu0 0
    %1144 = vmatprep.subr.bf16.mxu0 0
    %1145 = vmatpush1.bf16.msra.mxu0 0
    %1146 = vmatprep.subr.bf16.mxu0 0
    %1147 = vmatpush1.bf16.msra.mxu0 0
    %1148 = vmatprep.subr.bf16.mxu0 0
    %1149 = vmatpush1.bf16.msra.mxu0 0
    %1150 = vmatprep.mubr.bf16.mxu0 0
    %1151 = vmatmul.mubr.bf16.gmra.mrb[0].mxu0 %v1113
    %v1152 = vpop.f32.mrb[0].mxu0
    %v1153 = vadd.f32 0.0, %v1152
    %v1154 = vpop.f32.mrb[0].mxu0
    %v1155 = vpop.f32.mrb[0].mxu0
    %v1156 = vpop.f32.mrb[0].mxu0
    %1157 = vdwg.mxu0
    %1159 = vrot.lane.b32.xlu0 %v992, 96
    %v1160 = vpop.permute.xlu0 %1159
    %v1162 = vsel %vm348, %v1108, 0
    %v1165 = vsel %vm380, %v1160, 0
    %1167 = vmatprep.subr.bf16.mxu0 0
    %1168 = vmatpush1.bf16.msra.mxu0 %v1165
    %1169 = vmatprep.subr.bf16.mxu0 0
    %1170 = vmatpush1.bf16.msra.mxu0 0
    %1171 = vmatprep.subr.bf16.mxu0 0
    %1172 = vmatpush1.bf16.msra.mxu0 0
    %1173 = vmatprep.subr.bf16.mxu0 0
    %1174 = vmatpush1.bf16.msra.mxu0 0
    %1175 = vmatprep.subr.bf16.mxu0 0
    %1176 = vmatpush1.bf16.msra.mxu0 0
    %1177 = vmatprep.subr.bf16.mxu0 0
    %1178 = vmatpush1.bf16.msra.mxu0 0
    %1179 = vmatprep.subr.bf16.mxu0 0
    %1180 = vmatpush1.bf16.msra.mxu0 0
    %1181 = vmatprep.subr.bf16.mxu0 0
    %1182 = vmatpush1.bf16.msra.mxu0 0
    %1183 = vmatprep.subr.bf16.mxu0 0
    %1184 = vmatpush1.bf16.msra.mxu0 0
    %1185 = vmatprep.subr.bf16.mxu0 0
    %1186 = vmatpush1.bf16.msra.mxu0 0
    %1187 = vmatprep.subr.bf16.mxu0 0
    %1188 = vmatpush1.bf16.msra.mxu0 0
    %1189 = vmatprep.subr.bf16.mxu0 0
    %1190 = vmatpush1.bf16.msra.mxu0 0
    %1191 = vmatprep.subr.bf16.mxu0 0
    %1192 = vmatpush1.bf16.msra.mxu0 0
    %1193 = vmatprep.subr.bf16.mxu0 0
    %1194 = vmatpush1.bf16.msra.mxu0 0
    %1195 = vmatprep.subr.bf16.mxu0 0
    %1196 = vmatpush1.bf16.msra.mxu0 0
    %1197 = vmatprep.subr.bf16.mxu0 0
    %1198 = vmatpush1.bf16.msra.mxu0 0
    %1199 = vmatprep.mubr.bf16.mxu0 0
    %1200 = vmatmul.mubr.bf16.gmra.mrb[0].mxu0 %v1162
    %v1201 = vpop.f32.mrb[0].mxu0
    %v1202 = vadd.f32 0.0, %v1201
    %v1203 = vpop.f32.mrb[0].mxu0
    %v1204 = vpop.f32.mrb[0].mxu0
    %v1205 = vpop.f32.mrb[0].mxu0
    %1206 = vdwg.mxu0
    %v1207 = vld [vmem:[#allocation11] sm:$0xf]
    %v1208 = vld [vmem:[#allocation11 + $0x4] sm:$0xf]
    %v1209 = vpack.c.bf16 %v1202, %v1153
    %1211 = vrot.lane.b32.xlu0 %v989, 112
    %v1212 = vpop.permute.xlu0 %1211
    %1213 = vrot.lane.b32.xlu0 %v991, 112
    %v1214 = vpop.permute.xlu0 %1213
    %v1216 = vsel %vm252, %v1212, 0
    %v1219 = vsel %vm252, %v1214, 0
    %1221 = vmatprep.subr.bf16.mxu0 0
    %1222 = vmatpush1.bf16.xpose.msra.mxu0 %v1219
    %1223 = vmatprep.subr.bf16.mxu0 0
    %1224 = vmatpush1.bf16.xpose.msra.mxu0 0
    %1225 = vmatprep.subr.bf16.mxu0 0
    %1226 = vmatpush1.bf16.xpose.msra.mxu0 0
    %1227 = vmatprep.subr.bf16.mxu0 0
    %1228 = vmatpush1.bf16.xpose.msra.mxu0 0
    %1229 = vmatprep.subr.bf16.mxu0 0
    %1230 = vmatpush1.bf16.xpose.msra.mxu0 0
    %1231 = vmatprep.subr.bf16.mxu0 0
    %1232 = vmatpush1.bf16.xpose.msra.mxu0 0
    %1233 = vmatprep.subr.bf16.mxu0 0
    %1234 = vmatpush1.bf16.xpose.msra.mxu0 0
    %1235 = vmatprep.subr.bf16.mxu0 0
    %1236 = vmatpush1.bf16.xpose.msra.mxu0 0
    %1237 = vmatprep.subr.bf16.mxu0 0
    %1238 = vmatpush1.bf16.xpose.msra.mxu0 0
    %1239 = vmatprep.subr.bf16.mxu0 0
    %1240 = vmatpush1.bf16.xpose.msra.mxu0 0
    %1241 = vmatprep.subr.bf16.mxu0 0
    %1242 = vmatpush1.bf16.xpose.msra.mxu0 0
    %1243 = vmatprep.subr.bf16.mxu0 0
    %1244 = vmatpush1.bf16.xpose.msra.mxu0 0
    %1245 = vmatprep.subr.bf16.mxu0 0
    %1246 = vmatpush1.bf16.xpose.msra.mxu0 0
    %1247 = vmatprep.subr.bf16.mxu0 0
    %1248 = vmatpush1.bf16.xpose.msra.mxu0 0
    %1249 = vmatprep.subr.bf16.mxu0 0
    %1250 = vmatpush1.bf16.xpose.msra.mxu0 0
    %1251 = vmatprep.subr.bf16.mxu0 0
    %1252 = vmatpush1.bf16.xpose.msra.mxu0 0
    %1253 = vmatprep.mubr.bf16.mxu0 0
    %1254 = vmatmul.mubr.bf16.gmra.mrb[0].mxu0 %v1216
    %v1255 = vpop.f32.mrb[0].mxu0
    %v1256 = vadd.f32 0.0, %v1255
    %v1257 = vpop.f32.mrb[0].mxu0
    %v1258 = vpop.f32.mrb[0].mxu0
    %v1259 = vpop.f32.mrb[0].mxu0
    %1260 = vdwg.mxu0
    %1262 = vrot.lane.b32.xlu0 %v990, 112
    %v1263 = vpop.permute.xlu0 %1262
    %1264 = vrot.lane.b32.xlu0 %v992, 112
    %v1265 = vpop.permute.xlu0 %1264
    %v1267 = vsel %vm252, %v1263, 0
    %v1270 = vsel %vm252, %v1265, 0
    %1272 = vmatprep.subr.bf16.mxu0 0
    %1273 = vmatpush1.bf16.xpose.msra.mxu0 %v1270
    %1274 = vmatprep.subr.bf16.mxu0 0
    %1275 = vmatpush1.bf16.xpose.msra.mxu0 0
    %1276 = vmatprep.subr.bf16.mxu0 0
    %1277 = vmatpush1.bf16.xpose.msra.mxu0 0
    %1278 = vmatprep.subr.bf16.mxu0 0
    %1279 = vmatpush1.bf16.xpose.msra.mxu0 0
    %1280 = vmatprep.subr.bf16.mxu0 0
    %1281 = vmatpush1.bf16.xpose.msra.mxu0 0
    %1282 = vmatprep.subr.bf16.mxu0 0
    %1283 = vmatpush1.bf16.xpose.msra.mxu0 0
    %1284 = vmatprep.subr.bf16.mxu0 0
    %1285 = vmatpush1.bf16.xpose.msra.mxu0 0
    %1286 = vmatprep.subr.bf16.mxu0 0
    %1287 = vmatpush1.bf16.xpose.msra.mxu0 0
    %1288 = vmatprep.subr.bf16.mxu0 0
    %1289 = vmatpush1.bf16.xpose.msra.mxu0 0
    %1290 = vmatprep.subr.bf16.mxu0 0
    %1291 = vmatpush1.bf16.xpose.msra.mxu0 0
    %1292 = vmatprep.subr.bf16.mxu0 0
    %1293 = vmatpush1.bf16.xpose.msra.mxu0 0
    %1294 = vmatprep.subr.bf16.mxu0 0
    %1295 = vmatpush1.bf16.xpose.msra.mxu0 0
    %1296 = vmatprep.subr.bf16.mxu0 0
    %1297 = vmatpush1.bf16.xpose.msra.mxu0 0
    %1298 = vmatprep.subr.bf16.mxu0 0
    %1299 = vmatpush1.bf16.xpose.msra.mxu0 0
    %1300 = vmatprep.subr.bf16.mxu0 0
    %1301 = vmatpush1.bf16.xpose.msra.mxu0 0
    %1302 = vmatprep.subr.bf16.mxu0 0
    %1303 = vmatpush1.bf16.xpose.msra.mxu0 0
    %1304 = vmatprep.mubr.bf16.mxu0 0
    %1305 = vmatmul.mubr.bf16.gmra.mrb[0].mxu0 %v1267
    %v1306 = vpop.f32.mrb[0].mxu0
    %v1307 = vadd.f32 0.0, %v1306
    %v1308 = vpop.f32.mrb[0].mxu0
    %v1309 = vpop.f32.mrb[0].mxu0
    %v1310 = vpop.f32.mrb[0].mxu0
    %1311 = vdwg.mxu0
    %v1312 = vsel %vm348, %v1256, -inf
    %1313 = vmax.xlane.f32.xlu0 %v1312
    %v1314 = vpop.xlane.xlu0 %1313
    %v1315 = vsel %vm348, %v1307, -inf
    %1316 = vmax.xlane.f32.xlu0 %v1315
    %v1317 = vpop.xlane.xlu0 %1316
    %v1318 = vsub.f32 %v1256, %v1314
    %v1319 = vsub.f32 %v1307, %v1317
    %v1320 = vmul.f32 %v1318, 1.442695
    %v1321 = vpow.pop %v1320
    %v1322 = vmul.f32 %v1319, 1.442695
    %v1323 = vpow.pop %v1322
    %v1324 = vsel %vm348, %v1321, 0.0
    %1325 = vadd.xlane.f32.xlu0 %v1324
    %v1326 = vpop.xlane.xlu0 %1325
    %v1327 = vsel %vm348, %v1323, 0.0
    %1328 = vadd.xlane.f32.xlu0 %v1327
    %v1329 = vpop.xlane.xlu0 %1328
    %v1330 = vrcp.pop %v1326
    %v1331 = vrcp.pop %v1329
    %v1332 = vmul.f32 %v1321, %v1330
    %v1333 = vmul.f32 %v1323, %v1331
    %v1334 = vpack.c.bf16 %v1332, %v1332
    %v1335 = vpack.c.bf16 %v1333, %v1333
    %1336 = vrot.lane.b32.xlu0 %v991, 80
    %v1337 = vpop.permute.xlu0 %1336
    %v1339 = vsel %vm348, %v1334, 0
    %v1342 = vsel %vm380, %v1337, 0
    %1344 = vmatprep.subr.bf16.mxu0 0
    %1345 = vmatpush1.bf16.msra.mxu0 %v1342
    %1346 = vmatprep.subr.bf16.mxu0 0
    %1347 = vmatpush1.bf16.msra.mxu0 0
    %1348 = vmatprep.subr.bf16.mxu0 0
    %1349 = vmatpush1.bf16.msra.mxu0 0
    %1350 = vmatprep.subr.bf16.mxu0 0
    %1351 = vmatpush1.bf16.msra.mxu0 0
    %1352 = vmatprep.subr.bf16.mxu0 0
    %1353 = vmatpush1.bf16.msra.mxu0 0
    %1354 = vmatprep.subr.bf16.mxu0 0
    %1355 = vmatpush1.bf16.msra.mxu0 0
    %1356 = vmatprep.subr.bf16.mxu0 0
    %1357 = vmatpush1.bf16.msra.mxu0 0
    %1358 = vmatprep.subr.bf16.mxu0 0
    %1359 = vmatpush1.bf16.msra.mxu0 0
    %1360 = vmatprep.subr.bf16.mxu0 0
    %1361 = vmatpush1.bf16.msra.mxu0 0
    %1362 = vmatprep.subr.bf16.mxu0 0
    %1363 = vmatpush1.bf16.msra.mxu0 0
    %1364 = vmatprep.subr.bf16.mxu0 0
    %1365 = vmatpush1.bf16.msra.mxu0 0
    %1366 = vmatprep.subr.bf16.mxu0 0
    %1367 = vmatpush1.bf16.msra.mxu0 0
    %1368 = vmatprep.subr.bf16.mxu0 0
    %1369 = vmatpush1.bf16.msra.mxu0 0
    %1370 = vmatprep.subr.bf16.mxu0 0
    %1371 = vmatpush1.bf16.msra.mxu0 0
    %1372 = vmatprep.subr.bf16.mxu0 0
    %1373 = vmatpush1.bf16.msra.mxu0 0
    %1374 = vmatprep.subr.bf16.mxu0 0
    %1375 = vmatpush1.bf16.msra.mxu0 0
    %1376 = vmatprep.mubr.bf16.mxu0 0
    %1377 = vmatmul.mubr.bf16.gmra.mrb[0].mxu0 %v1339
    %v1378 = vpop.f32.mrb[0].mxu0
    %v1379 = vadd.f32 0.0, %v1378
    %v1380 = vpop.f32.mrb[0].mxu0
    %v1381 = vpop.f32.mrb[0].mxu0
    %v1382 = vpop.f32.mrb[0].mxu0
    %1383 = vdwg.mxu0
    %1384 = vrot.lane.b32.xlu0 %v992, 80
    %v1385 = vpop.permute.xlu0 %1384
    %v1387 = vsel %vm348, %v1335, 0
    %v1390 = vsel %vm380, %v1385, 0
    %1392 = vmatprep.subr.bf16.mxu0 0
    %1393 = vmatpush1.bf16.msra.mxu0 %v1390
    %1394 = vmatprep.subr.bf16.mxu0 0
    %1395 = vmatpush1.bf16.msra.mxu0 0
    %1396 = vmatprep.subr.bf16.mxu0 0
    %1397 = vmatpush1.bf16.msra.mxu0 0
    %1398 = vmatprep.subr.bf16.mxu0 0
    %1399 = vmatpush1.bf16.msra.mxu0 0
    %1400 = vmatprep.subr.bf16.mxu0 0
    %1401 = vmatpush1.bf16.msra.mxu0 0
    %1402 = vmatprep.subr.bf16.mxu0 0
    %1403 = vmatpush1.bf16.msra.mxu0 0
    %1404 = vmatprep.subr.bf16.mxu0 0
    %1405 = vmatpush1.bf16.msra.mxu0 0
    %1406 = vmatprep.subr.bf16.mxu0 0
    %1407 = vmatpush1.bf16.msra.mxu0 0
    %1408 = vmatprep.subr.bf16.mxu0 0
    %1409 = vmatpush1.bf16.msra.mxu0 0
    %1410 = vmatprep.subr.bf16.mxu0 0
    %1411 = vmatpush1.bf16.msra.mxu0 0
    %1412 = vmatprep.subr.bf16.mxu0 0
    %1413 = vmatpush1.bf16.msra.mxu0 0
    %1414 = vmatprep.subr.bf16.mxu0 0
    %1415 = vmatpush1.bf16.msra.mxu0 0
    %1416 = vmatprep.subr.bf16.mxu0 0
    %1417 = vmatpush1.bf16.msra.mxu0 0
    %1418 = vmatprep.subr.bf16.mxu0 0
    %1419 = vmatpush1.bf16.msra.mxu0 0
    %1420 = vmatprep.subr.bf16.mxu0 0
    %1421 = vmatpush1.bf16.msra.mxu0 0
    %1422 = vmatprep.subr.bf16.mxu0 0
    %1423 = vmatpush1.bf16.msra.mxu0 0
    %1424 = vmatprep.mubr.bf16.mxu0 0
    %1425 = vmatmul.mubr.bf16.gmra.mrb[0].mxu0 %v1387
    %v1426 = vpop.f32.mrb[0].mxu0
    %v1427 = vadd.f32 0.0, %v1426
    %v1428 = vpop.f32.mrb[0].mxu0
    %v1429 = vpop.f32.mrb[0].mxu0
    %v1430 = vpop.f32.mrb[0].mxu0
    %1431 = vdwg.mxu0
    %v1432 = vld [vmem:[#allocation11 + $0x8] sm:$0xf]
    %v1433 = vld [vmem:[#allocation11 + $0xc] sm:$0xf]
    %v1434 = vpack.c.bf16 %v1427, %v1379
    %v1437 = vunpack.c.l.b16 %v1432
    %v1438 = vunpack.c.l.b16 %v1433
    %v1439 = vpack.c.b16 %v1438, %v1437
    %v1442 = vsel %vm252, %v1434, 0
    %1444 = vmatprep.subr.bf16.mxu0 0
    %1445 = vmatpush1.bf16.msra.mxu0 %v1439
    %1446 = vmatprep.subr.bf16.mxu0 0
    %1447 = vmatpush1.bf16.msra.mxu0 0
    %1448 = vmatprep.subr.bf16.mxu0 0
    %1449 = vmatpush1.bf16.msra.mxu0 0
    %1450 = vmatprep.subr.bf16.mxu0 0
    %1451 = vmatpush1.bf16.msra.mxu0 0
    %1452 = vmatprep.subr.bf16.mxu0 0
    %1453 = vmatpush1.bf16.msra.mxu0 0
    %1454 = vmatprep.subr.bf16.mxu0 0
    %1455 = vmatpush1.bf16.msra.mxu0 0
    %1456 = vmatprep.subr.bf16.mxu0 0
    %1457 = vmatpush1.bf16.msra.mxu0 0
    %1458 = vmatprep.subr.bf16.mxu0 0
    %1459 = vmatpush1.bf16.msra.mxu0 0
    %1460 = vmatprep.subr.bf16.mxu0 0
    %1461 = vmatpush1.bf16.msra.mxu0 0
    %1462 = vmatprep.subr.bf16.mxu0 0
    %1463 = vmatpush1.bf16.msra.mxu0 0
    %1464 = vmatprep.subr.bf16.mxu0 0
    %1465 = vmatpush1.bf16.msra.mxu0 0
    %1466 = vmatprep.subr.bf16.mxu0 0
    %1467 = vmatpush1.bf16.msra.mxu0 0
    %1468 = vmatprep.subr.bf16.mxu0 0
    %1469 = vmatpush1.bf16.msra.mxu0 0
    %1470 = vmatprep.subr.bf16.mxu0 0
    %1471 = vmatpush1.bf16.msra.mxu0 0
    %1472 = vmatprep.subr.bf16.mxu0 0
    %1473 = vmatpush1.bf16.msra.mxu0 0
    %1474 = vmatprep.subr.bf16.mxu0 0
    %1475 = vmatpush1.bf16.msra.mxu0 0
    %1476 = vmatprep.mubr.bf16.mxu0 0
    %1477 = vmatmul.mubr.bf16.gmra.mrb[0].mxu0 %v1442
    %v1478 = vpop.f32.mrb[0].mxu0
    %v1479 = vadd.f32 0.0, %v1478
    %v1480 = vpop.f32.mrb[0].mxu0
    %v1481 = vpop.f32.mrb[0].mxu0
    %v1482 = vadd.f32 0.0, %v1481
    %v1483 = vpop.f32.mrb[0].mxu0
    %1484 = vdwg.mxu0
    %v1487 = vunpack.c.l.b16 %v1207
    %v1488 = vunpack.c.l.b16 %v1208
    %v1489 = vpack.c.b16 %v1488, %v1487
    %v1492 = vsel %vm252, %v1209, 0
    %1494 = vmatprep.subr.bf16.mxu0 0
    %1495 = vmatpush1.bf16.msra.mxu0 %v1489
    %1496 = vmatprep.subr.bf16.mxu0 0
    %1497 = vmatpush1.bf16.msra.mxu0 0
    %1498 = vmatprep.subr.bf16.mxu0 0
    %1499 = vmatpush1.bf16.msra.mxu0 0
    %1500 = vmatprep.subr.bf16.mxu0 0
    %1501 = vmatpush1.bf16.msra.mxu0 0
    %1502 = vmatprep.subr.bf16.mxu0 0
    %1503 = vmatpush1.bf16.msra.mxu0 0
    %1504 = vmatprep.subr.bf16.mxu0 0
    %1505 = vmatpush1.bf16.msra.mxu0 0
    %1506 = vmatprep.subr.bf16.mxu0 0
    %1507 = vmatpush1.bf16.msra.mxu0 0
    %1508 = vmatprep.subr.bf16.mxu0 0
    %1509 = vmatpush1.bf16.msra.mxu0 0
    %1510 = vmatprep.subr.bf16.mxu0 0
    %1511 = vmatpush1.bf16.msra.mxu0 0
    %1512 = vmatprep.subr.bf16.mxu0 0
    %1513 = vmatpush1.bf16.msra.mxu0 0
    %1514 = vmatprep.subr.bf16.mxu0 0
    %1515 = vmatpush1.bf16.msra.mxu0 0
    %1516 = vmatprep.subr.bf16.mxu0 0
    %1517 = vmatpush1.bf16.msra.mxu0 0
    %1518 = vmatprep.subr.bf16.mxu0 0
    %1519 = vmatpush1.bf16.msra.mxu0 0
    %1520 = vmatprep.subr.bf16.mxu0 0
    %1521 = vmatpush1.bf16.msra.mxu0 0
    %1522 = vmatprep.subr.bf16.mxu0 0
    %1523 = vmatpush1.bf16.msra.mxu0 0
    %1524 = vmatprep.subr.bf16.mxu0 0
    %1525 = vmatpush1.bf16.msra.mxu0 0
    %1526 = vmatprep.mubr.bf16.mxu0 0
    %1527 = vmatmul.mubr.bf16.gmra.mrb[0].mxu0 %v1492
    %v1528 = vpop.f32.mrb[0].mxu0
    %v1529 = vadd.f32 %v1479, %v1528
    %v1530 = vpop.f32.mrb[0].mxu0
    %v1531 = vpop.f32.mrb[0].mxu0
    %v1532 = vadd.f32 %v1482, %v1531
    %v1533 = vpop.f32.mrb[0].mxu0
    %1534 = vdwg.mxu0
    %v1535 = vld [vmem:[#allocation13] sm:$0x1]
    %v1537 = vlaneseq
    %v1538 = vshrl.u32 %v1537, 7
    %v1539 = vsub.s32 0, %v1538
    %v1540 = vrot.slane %v1535, %v1539
    %v1542 = vadd.f32 %v1529, %v1540
    %v1543 = vadd.f32 %v1532, %v1540
    %v1544 = vmax.f32 %v1542, 0.0
    %v1545 = vmax.f32 %v1543, 0.0
    %v1546 = vld [vmem:[#allocation14] sm:$0x1]
    %v1547 = vld [vmem:[#allocation16] sm:$0x1]
    %v1548 = vadd.f32 %v865, %v1544
    %v1549 = vadd.f32 %v866, %v1545
    %v1550 = vsel %vm202, %v1548, 0.0
    %1551 = vadd.xlane.f32.xlu0 %v1550
    %v1552 = vpop.xlane.xlu0 %1551
    %v1553 = vsel %vm202, %v1549, 0.0
    %1554 = vadd.xlane.f32.xlu0 %v1553
    %v1555 = vpop.xlane.xlu0 %1554
    %v1556 = vmul.f32 %v1552, %v830
    %v1557 = vmul.f32 %v1555, %v830
    %v1558 = vsub.f32 %v1548, %v1556
    %v1559 = vsub.f32 %v1549, %v1557
    %v1560 = vmul.f32 %v1558, %v1558
    %v1561 = vmul.f32 %v1559, %v1559
    %v1562 = vsel %vm202, %v1560, 0.0
    %1563 = vadd.xlane.f32.xlu0 %v1562
    %v1564 = vpop.xlane.xlu0 %1563
    %v1565 = vsel %vm202, %v1561, 0.0
    %1566 = vadd.xlane.f32.xlu0 %v1565
    %v1567 = vpop.xlane.xlu0 %1566
    %v1568 = vmul.f32 %v1564, %v830
    %v1569 = vmul.f32 %v1567, %v830
    %v1570 = vadd.f32 %v1568, 1e-05
    %v1571 = vadd.f32 %v1569, 1e-05
    %v1572 = vrsqrt.pop %v1570
    %v1573 = vrsqrt.pop %v1571
    %v1574 = vmul.f32 %v1558, %v1572
    %v1575 = vmul.f32 %v1559, %v1573
    %v1577 = vlaneseq
    %v1578 = vshrl.u32 %v1577, 7
    %v1579 = vsub.s32 0, %v1578
    %v1580 = vrot.slane %v1546, %v1579
    %v1582 = vmul.f32 %v1574, %v1580
    %v1583 = vmul.f32 %v1575, %v1580
    %v1585 = vlaneseq
    %v1586 = vshrl.u32 %v1585, 7
    %v1587 = vsub.s32 0, %v1586
    %v1588 = vrot.slane %v1547, %v1587
    %v1590 = vadd.f32 %v1582, %v1588
    %v1591 = vadd.f32 %v1583, %v1588
    %v1592 = vld [vmem:[%s14] sm:$0xf]
    %v1593 = vld [vmem:[%s14 + $0x4] sm:$0xf]
    %v1594 = vld [vmem:[%s14 + $0x8] sm:$0xf]
    %v1595 = vld [vmem:[%s14 + $0xc] sm:$0xf]
    %v1596 = vpack.c.bf16 %v1591, %v1590
    %v1597 = vld [vmem:[%s15] sm:$0x1]
    %v1599 = vlaneseq
    %v1600 = vshrl.u32 %v1599, 7
    %v1601 = vsub.s32 0, %v1600
    %v1602 = vrot.slane %v1597, %v1601
    %v1608 = vunpack.c.l.b16 %v1592
    %v1609 = vunpack.c.l.b16 %v1593
    %v1610 = vunpack.c.l.b16 %v1594
    %v1611 = vunpack.c.l.b16 %v1595
    %v1612 = vpack.c.b16 %v1609, %v1608
    %v1613 = vpack.c.b16 %v1611, %v1610
    %v1617 = vsel %vm202, %v1596, 0
    %1619 = vmatprep.subr.bf16.mxu0 0
    %1620 = vmatpush1.bf16.msra.mxu0 %v1612
    %1621 = vmatprep.subr.bf16.mxu0 0
    %1622 = vmatpush1.bf16.msra.mxu0 %v1613
    %1623 = vmatprep.subr.bf16.mxu0 0
    %1624 = vmatpush1.bf16.msra.mxu0 0
    %1625 = vmatprep.subr.bf16.mxu0 0
    %1626 = vmatpush1.bf16.msra.mxu0 0
    %1627 = vmatprep.subr.bf16.mxu0 0
    %1628 = vmatpush1.bf16.msra.mxu0 0
    %1629 = vmatprep.subr.bf16.mxu0 0
    %1630 = vmatpush1.bf16.msra.mxu0 0
    %1631 = vmatprep.subr.bf16.mxu0 0
    %1632 = vmatpush1.bf16.msra.mxu0 0
    %1633 = vmatprep.subr.bf16.mxu0 0
    %1634 = vmatpush1.bf16.msra.mxu0 0
    %1635 = vmatprep.subr.bf16.mxu0 0
    %1636 = vmatpush1.bf16.msra.mxu0 0
    %1637 = vmatprep.subr.bf16.mxu0 0
    %1638 = vmatpush1.bf16.msra.mxu0 0
    %1639 = vmatprep.subr.bf16.mxu0 0
    %1640 = vmatpush1.bf16.msra.mxu0 0
    %1641 = vmatprep.subr.bf16.mxu0 0
    %1642 = vmatpush1.bf16.msra.mxu0 0
    %1643 = vmatprep.subr.bf16.mxu0 0
    %1644 = vmatpush1.bf16.msra.mxu0 0
    %1645 = vmatprep.subr.bf16.mxu0 0
    %1646 = vmatpush1.bf16.msra.mxu0 0
    %1647 = vmatprep.subr.bf16.mxu0 0
    %1648 = vmatpush1.bf16.msra.mxu0 0
    %1649 = vmatprep.subr.bf16.mxu0 0
    %1650 = vmatpush1.bf16.msra.mxu0 0
    %1651 = vmatprep.mubr.bf16.mxu0 0
    %1652 = vmatmul.mubr.bf16.gmra.mrb[0].mxu0 %v1617
    %v1653 = vpop.f32.mrb[0].mxu0
    %v1654 = vadd.f32 %v1602, %v1653
    %v1655 = vpop.f32.mrb[0].mxu0
    %v1656 = vpop.f32.mrb[0].mxu0
    %v1657 = vadd.f32 %v1602, %v1656
    %v1658 = vpop.f32.mrb[0].mxu0
    %1659 = vdwg.mxu0
    %v1660 = vmul.f32 %v1654, %v1654
    %v1661 = vmul.f32 %v1657, %v1657
    %v1662 = vmul.f32 %v1654, %v1660
    %v1663 = vmul.f32 %v1657, %v1661
    %v1664 = vmul.f32 %v1662, 0.044715
    %v1665 = vmul.f32 %v1663, 0.044715
    %v1666 = vadd.f32 %v1654, %v1664
    %v1667 = vadd.f32 %v1657, %v1665
    %v1668 = vmul.f32 %v1666, 0.7978846
    %v1669 = vmul.f32 %v1667, 0.7978846
    %v1670 = vtanh.pop %v1668
    %v1671 = vtanh.pop %v1669
    %v1672 = vadd.f32 %v1670, 1.0
    %v1673 = vadd.f32 %v1671, 1.0
    %v1674 = vmul.f32 %v1672, 0.5
    %v1675 = vmul.f32 %v1673, 0.5
    %v1676 = vmul.f32 %v1654, %v1674
    %v1677 = vmul.f32 %v1657, %v1675
    %v1678 = vld [vmem:[%s16] sm:$0xf]
    %v1679 = vld [vmem:[%s16 + $0x4] sm:$0xf]
    %v1680 = vld [vmem:[%s16 + $0x8] sm:$0xf]
    %v1681 = vld [vmem:[%s16 + $0xc] sm:$0xf]
    %v1682 = vld [vmem:[%s16 + $0x10] sm:$0xf]
    %v1683 = vld [vmem:[%s16 + $0x14] sm:$0xf]
    %v1684 = vld [vmem:[%s16 + $0x18] sm:$0xf]
    %v1685 = vld [vmem:[%s16 + $0x1c] sm:$0xf]
    %v1686 = vpack.c.bf16 %v1677, %v1676
    %v1687 = vld [vmem:[%s17] sm:$0x1]
    %v1689 = vlaneseq
    %v1690 = vshrl.u32 %v1689, 7
    %v1691 = vsub.s32 0, %v1690
    %v1692 = vrot.slane %v1687, %v1691
    %v1702 = vunpack.c.l.b16 %v1678
    %v1703 = vunpack.c.l.b16 %v1679
    %v1704 = vunpack.c.l.b16 %v1680
    %v1705 = vunpack.c.l.b16 %v1681
    %v1706 = vunpack.c.l.b16 %v1682
    %v1707 = vunpack.c.l.b16 %v1683
    %v1708 = vunpack.c.l.b16 %v1684
    %v1709 = vunpack.c.l.b16 %v1685
    %v1710 = vpack.c.b16 %v1703, %v1702
    %v1711 = vpack.c.b16 %v1705, %v1704
    %v1712 = vpack.c.b16 %v1707, %v1706
    %v1713 = vpack.c.b16 %v1709, %v1708
    %vm1718 = vcmask 523264
    %v1720 = vsel %vm1718, %v1686, 0
    %1722 = vmatprep.subr.bf16.mxu0 0
    %1723 = vmatpush1.bf16.msra.mxu0 %v1710
    %1724 = vmatprep.subr.bf16.mxu0 0
    %1725 = vmatpush1.bf16.msra.mxu0 %v1711
    %1726 = vmatprep.subr.bf16.mxu0 0
    %1727 = vmatpush1.bf16.msra.mxu0 %v1712
    %1728 = vmatprep.subr.bf16.mxu0 0
    %1729 = vmatpush1.bf16.msra.mxu0 %v1713
    %1730 = vmatprep.subr.bf16.mxu0 0
    %1731 = vmatpush1.bf16.msra.mxu0 0
    %1732 = vmatprep.subr.bf16.mxu0 0
    %1733 = vmatpush1.bf16.msra.mxu0 0
    %1734 = vmatprep.subr.bf16.mxu0 0
    %1735 = vmatpush1.bf16.msra.mxu0 0
    %1736 = vmatprep.subr.bf16.mxu0 0
    %1737 = vmatpush1.bf16.msra.mxu0 0
    %1738 = vmatprep.subr.bf16.mxu0 0
    %1739 = vmatpush1.bf16.msra.mxu0 0
    %1740 = vmatprep.subr.bf16.mxu0 0
    %1741 = vmatpush1.bf16.msra.mxu0 0
    %1742 = vmatprep.subr.bf16.mxu0 0
    %1743 = vmatpush1.bf16.msra.mxu0 0
    %1744 = vmatprep.subr.bf16.mxu0 0
    %1745 = vmatpush1.bf16.msra.mxu0 0
    %1746 = vmatprep.subr.bf16.mxu0 0
    %1747 = vmatpush1.bf16.msra.mxu0 0
    %1748 = vmatprep.subr.bf16.mxu0 0
    %1749 = vmatpush1.bf16.msra.mxu0 0
    %1750 = vmatprep.subr.bf16.mxu0 0
    %1751 = vmatpush1.bf16.msra.mxu0 0
    %1752 = vmatprep.subr.bf16.mxu0 0
    %1753 = vmatpush1.bf16.msra.mxu0 0
    %1754 = vmatprep.mubr.bf16.mxu0 0
    %1755 = vmatmul.mubr.bf16.gmra.mrb[0].mxu0 %v1720
    %v1756 = vpop.f32.mrb[0].mxu0
    %v1757 = vadd.f32 %v1692, %v1756
    %v1758 = vpop.f32.mrb[0].mxu0
    %v1759 = vpop.f32.mrb[0].mxu0
    %v1760 = vadd.f32 %v1692, %v1759
    %v1761 = vpop.f32.mrb[0].mxu0
    %1762 = vdwg.mxu0
    %v1763 = vld [vmem:[%s18] sm:$0x1]
    %v1764 = vld [vmem:[%s19] sm:$0x1]
    %v1765 = vadd.f32 %v1590, %v1757
    %v1766 = vadd.f32 %v1591, %v1760
    %v1767 = vsel %vm202, %v1765, 0.0
    %1768 = vadd.xlane.f32.xlu0 %v1767
    %v1769 = vpop.xlane.xlu0 %1768
    %v1770 = vsel %vm202, %v1766, 0.0
    %1771 = vadd.xlane.f32.xlu0 %v1770
    %v1772 = vpop.xlane.xlu0 %1771
    %v1773 = vmul.f32 %v1769, %v830
    %v1774 = vmul.f32 %v1772, %v830
    %v1775 = vsub.f32 %v1765, %v1773
    %v1776 = vsub.f32 %v1766, %v1774
    %v1777 = vmul.f32 %v1775, %v1775
    %v1778 = vmul.f32 %v1776, %v1776
    %v1779 = vsel %vm202, %v1777, 0.0
    %1780 = vadd.xlane.f32.xlu0 %v1779
    %v1781 = vpop.xlane.xlu0 %1780
    %v1782 = vsel %vm202, %v1778, 0.0
    %1783 = vadd.xlane.f32.xlu0 %v1782
    %v1784 = vpop.xlane.xlu0 %1783
    %v1785 = vmul.f32 %v1781, %v830
    %v1786 = vmul.f32 %v1784, %v830
    %v1787 = vadd.f32 %v1785, 1e-05
    %v1788 = vadd.f32 %v1786, 1e-05
    %v1789 = vrsqrt.pop %v1787
    %v1790 = vrsqrt.pop %v1788
    %v1791 = vmul.f32 %v1775, %v1789
    %v1792 = vmul.f32 %v1776, %v1790
    %v1794 = vlaneseq
    %v1795 = vshrl.u32 %v1794, 7
    %v1796 = vsub.s32 0, %v1795
    %v1797 = vrot.slane %v1763, %v1796
    %v1799 = vmul.f32 %v1791, %v1797
    %v1800 = vmul.f32 %v1792, %v1797
    %v1802 = vlaneseq
    %v1803 = vshrl.u32 %v1802, 7
    %v1804 = vsub.s32 0, %v1803
    %v1805 = vrot.slane %v1764, %v1804
    %v1807 = vadd.f32 %v1799, %v1805
    %v1808 = vadd.f32 %v1800, %v1805
    %1809 = vst.msk [vmem:[#allocation17] sm:$0xff] %vm202, %v1807
    %1810 = vst.msk [vmem:[#allocation17 + $0x8] sm:$0xff] %vm202, %v1808
    // Predicated region
    $region118: #{tpu_custom_call.1} parent=1 // pred_check
      _
    $region119: #{tpu_custom_call.1} parent=1 // pred_check_branch
      %1812 = sbr.rel (0) target = $region121
    $region120: #{tpu_custom_call.1} parent=1 // pred_region
      %s1814 = ssub.s32 256, 256
      %1815 = vsyncadd [#allocation4], %s1814
      %s1816 = sshll.u32 [#allocation17], 4
      %s1817 = int_to_ptr.vmem [resolvable:$true] %s1816
      %1822 = dma.vmem_to_hbm [thread:$0]  %s1817, 256, %s20, [#allocation4], 128, 128, 8
    $region121: #{tpu_custom_call.1} parent=1 // pred_fallthru
      _
    // Predicated region
    $region122: #{tpu_custom_call.1} parent=1 // pred_check
      _
    $region123: #{tpu_custom_call.1} parent=1 // pred_check_branch
      %1824 = sbr.rel (0) target = $region125
    $region124: #{tpu_custom_call.1} parent=1 // pred_region
      %s1826 = ssub.s32 256, 256
      %1827 = vsyncadd [#allocation19], %s1826
      %s1828 = sshll.u32 [#allocation18], 4
      %s1829 = int_to_ptr.vmem [resolvable:$true] %s1828
      %1834 = dma.vmem_to_hbm [thread:$0]  %s1829, 256, %s21, [#allocation19], 128, 128, 8
    $region125: #{tpu_custom_call.1} parent=1 // pred_fallthru
      _
    // Predicated region
    $region126: #{tpu_custom_call.1} parent=1 // pred_check
      _
    $region127: #{tpu_custom_call.1} parent=1 // pred_check_branch
      %1836 = sbr.rel (0) target = $region129
    $region128: #{tpu_custom_call.1} parent=1 // pred_region
      %1837 = dma.done [#allocation4], 256
    $region129: #{tpu_custom_call.1} parent=1 // pred_fallthru
      _
    // Predicated region
    $region130: #{tpu_custom_call.1} parent=1 // pred_check
      _
    $region131: #{tpu_custom_call.1} parent=1 // pred_check_branch
      %1839 = sbr.rel (0) target = $region133
    $region132: #{tpu_custom_call.1} parent=1 // pred_region
      %1840 = dma.done [#allocation19], 256
    $region133: #{tpu_custom_call.1} parent=1 // pred_fallthru
      _
    %1841 = vsyncpa [#allocation3], 1
    %1842 = vsyncpa [#allocation6], 1
    %1843 = vsyncpa [#allocation9], 1
    %1844 = vsyncpa [#allocation12], 1
    %1845 = vsyncpa [#allocation15], 1
    %1846 = vsyncpa [#allocation4], 1
    %1847 = vsyncpa [#allocation19], 1

</llo_original>
